<compile_context>
chip_gen: v7x
topology: tpu7x:2x2x1
jax: 0.10.0
libtpu: 0.0.40
codegen_flags: <defaults>
</compile_context>

<pallas_src>
import functools

import jax
import jax.numpy as jnp
from jax.experimental import pallas as pl
from jax.experimental.pallas import tpu as pltpu

HIDDEN = 512
LANE = 128


def _round_up(x, m):
    return (x + m - 1) // m * m


def _pad2d(a, rows, cols):
    return jnp.pad(a, ((0, rows - a.shape[0]), (0, cols - a.shape[1])))


# ----------------------------------------------------------------------------
# Kernel: fused 4-layer MLP on one batch tile.  Weights/biases are
# VMEM-resident (index_map always returns block (0, 0)); only the x tile and
# the two output tiles move per grid step.
# ----------------------------------------------------------------------------
def autoencoder_kernel(x_ref,
                       w1_ref, b1_ref,
                       w2_ref, b2_ref,
                       w3_ref, b3_ref,
                       w4_ref, b4_ref,
                       enc_ref, dec_ref):
    # (TILE_M, input_dim) f32 -> bf16 for the MXU (cast is VPU work, hidden
    # under the matmuls); accumulation stays f32.
    x = x_ref[...].astype(jnp.bfloat16)

    # encoder
    h1 = jnp.dot(x, w1_ref[...], preferred_element_type=jnp.float32) + b1_ref[...]
    h1 = jnp.maximum(h1, 0.0)
    enc = jnp.dot(h1.astype(jnp.bfloat16), w2_ref[...],
                  preferred_element_type=jnp.float32) + b2_ref[...]
    enc = jnp.maximum(enc, 0.0)          # padded enc lanes are exactly 0

    # decoder
    h2 = jnp.dot(enc.astype(jnp.bfloat16), w3_ref[...],
                 preferred_element_type=jnp.float32) + b3_ref[...]
    h2 = jnp.maximum(h2, 0.0)
    dec = jnp.dot(h2.astype(jnp.bfloat16), w4_ref[...],
                  preferred_element_type=jnp.float32) + b4_ref[...]
    dec = jax.nn.sigmoid(dec)            # padded dec lanes hold 0.5, trimmed later

    enc_ref[...] = enc.astype(enc_ref.dtype)   # bf16 stores: halves output HBM bytes
    dec_ref[...] = dec.astype(dec_ref.dtype)


# ----------------------------------------------------------------------------
# One-time parameter prep (outside the per-call path): pad output features to
# 128 lanes, cast weights to bf16, keep biases f32.
# ----------------------------------------------------------------------------
def prepare_params(params):
    input_dim, hidden = params["w1"].shape
    encoding_dim = params["w2"].shape[1]
    enc_pad = _round_up(encoding_dim, LANE)
    out_pad = _round_up(input_dim, LANE)

    return dict(
        w1=params["w1"].astype(jnp.bfloat16),                       # (input_dim, 512), K unpadded
        b1=params["b1"].astype(jnp.float32),                        # (1, 512)
        w2=_pad2d(params["w2"], hidden, enc_pad).astype(jnp.bfloat16),
        b2=_pad2d(params["b2"], 1, enc_pad).astype(jnp.float32),
        w3=_pad2d(params["w3"], enc_pad, hidden).astype(jnp.bfloat16),
        b3=params["b3"].astype(jnp.float32),
        w4=_pad2d(params["w4"], hidden, out_pad).astype(jnp.bfloat16),
        b4=_pad2d(params["b4"], 1, out_pad).astype(jnp.float32),
    )


def _choose_tile_m(n, tile_m_max):
    # Largest batch tile <= tile_m_max that still leaves >= 2 grid steps when
    # the batch allows it (so v7x's two TensorCores both get work).  Always a
    # multiple of 8 sublanes.
    half = max(8, _round_up(pl.cdiv(n, 2), 8))
    return min(tile_m_max, half)


# ----------------------------------------------------------------------------
# Forward wrapper.
# ----------------------------------------------------------------------------
def autoencoder_forward(x, prepped, *, encoding_dim, tile_m=512, trim=True):
    """x: (N, input_dim) f32.  prepped: output of prepare_params().
    Returns (encoded, decoded) in bfloat16."""
    n, input_dim = x.shape
    enc_pad = prepped["w2"].shape[1]
    out_pad = prepped["w4"].shape[1]

    tm = _choose_tile_m(n, tile_m)
    n_pad = _round_up(n, tm)

    # Rows-only pad (no feature padding, no dtype cast) -- usually a no-op.
    x_p = x if n_pad == n else jnp.pad(x, ((0, n_pad - n), (0, 0)))

    grid = (n_pad // tm,)

    # Weights / biases: full-array blocks, same block every step -> VMEM-resident.
    resident = lambda a: pl.BlockSpec(a.shape, lambda i: (0, 0))

    in_specs = [
        pl.BlockSpec((tm, input_dim), lambda i: (i, 0)),   # x tile (minor dim == full dim)
        resident(prepped["w1"]), resident(prepped["b1"]),
        resident(prepped["w2"]), resident(prepped["b2"]),
        resident(prepped["w3"]), resident(prepped["b3"]),
        resident(prepped["w4"]), resident(prepped["b4"]),
    ]
    out_specs = (
        pl.BlockSpec((tm, enc_pad), lambda i: (i, 0)),
        pl.BlockSpec((tm, out_pad), lambda i: (i, 0)),
    )

    fn = pl.pallas_call(
        autoencoder_kernel,
        out_shape=(
            jax.ShapeDtypeStruct((n_pad, enc_pad), jnp.bfloat16),
            jax.ShapeDtypeStruct((n_pad, out_pad), jnp.bfloat16),
        ),
        grid=grid,
        in_specs=in_specs,
        out_specs=out_specs,
        compiler_params=pltpu.CompilerParams(
            dimension_semantics=("parallel",),
        ),
    )
    enc_p, dec_p = fn(x_p, prepped["w1"], prepped["b1"], prepped["w2"], prepped["b2"],
                      prepped["w3"], prepped["b3"], prepped["w4"], prepped["b4"])
    if trim:
        return enc_p[:n, :encoding_dim], dec_p[:n, :input_dim]
    return enc_p, dec_p


# ----------------------------------------------------------------------------
# Init (PyTorch nn.Linear default init, weights pre-transposed to (in, out)).
# ----------------------------------------------------------------------------
def init_params(key, input_dim, encoding_dim, hidden=HIDDEN):
    def linear(k, fan_in, fan_out):
        kw, kb = jax.random.split(k)
        bound = 1.0 / jnp.sqrt(fan_in)
        w = jax.random.uniform(kw, (fan_in, fan_out), jnp.float32, -bound, bound)
        b = jax.random.uniform(kb, (1, fan_out), jnp.float32, -bound, bound)
        return w, b

    k1, k2, k3, k4 = jax.random.split(key, 4)
    w1, b1 = linear(k1, input_dim, hidden)        # Linear(input_dim, 512)
    w2, b2 = linear(k2, hidden, encoding_dim)     # Linear(512, encoding_dim)
    w3, b3 = linear(k3, encoding_dim, hidden)     # Linear(encoding_dim, 512)
    w4, b4 = linear(k4, hidden, input_dim)        # Linear(512, input_dim)
    return dict(w1=w1, b1=b1, w2=w2, b2=b2, w3=w3, b3=b3, w4=w4, b4=b4)


def reference_forward(x, p):
    """Pure-JAX reference mirroring the kernel numerics (bf16 operands, f32 accum)."""
    bf = jnp.bfloat16
    h1 = jnp.maximum(jnp.dot(x.astype(bf), p["w1"].astype(bf),
                             preferred_element_type=jnp.float32) + p["b1"], 0.0)
    enc = jnp.maximum(jnp.dot(h1.astype(bf), p["w2"].astype(bf),
                              preferred_element_type=jnp.float32) + p["b2"], 0.0)
    h2 = jnp.maximum(jnp.dot(enc.astype(bf), p["w3"].astype(bf),
                             preferred_element_type=jnp.float32) + p["b3"], 0.0)
    dec = jax.nn.sigmoid(jnp.dot(h2.astype(bf), p["w4"].astype(bf),
                                 preferred_element_type=jnp.float32) + p["b4"])
    return enc, dec


if __name__ == "__main__":
    key = jax.random.PRNGKey(0)
    kx, kp = jax.random.split(key)

    batch = 256          # -> adaptive tile_m = 128, grid = (2,)
    input_dim = 32       # stands in for X_tensor.shape[1]
    encoding_dim = 64

    x = jax.random.normal(kx, (batch, input_dim), jnp.float32)
    params = init_params(kp, input_dim, encoding_dim)
    prepped = prepare_params(params)     # one-time pad + bf16 cast, hoisted out of forward

    fwd = jax.jit(autoencoder_forward,
                  static_argnames=("encoding_dim", "tile_m", "trim"))
    enc, dec = fwd(x, prepped, encoding_dim=encoding_dim)
    enc = jax.block_until_ready(enc)
    dec = jax.block_until_ready(dec)

    enc_ref, dec_ref = reference_forward(x, params)
    assert enc.shape == (batch, encoding_dim) and dec.shape == (batch, input_dim)
    assert enc.dtype == jnp.bfloat16 and dec.dtype == jnp.bfloat16
    assert jnp.allclose(enc.astype(jnp.float32), enc_ref, atol=2e-2, rtol=2e-2)
    assert jnp.allclose(dec.astype(jnp.float32), dec_ref, atol=2e-2, rtol=2e-2)

    print("KERNEL_OK")
</pallas_src>

<mosaic_0001>
module attributes {stable_mosaic.version = 11 : i64} {
  func.func @autoencoder_kernel(%arg0: i32, %arg1: memref<128x32xf32, #tpu.memory_space<vmem>>, %arg2: memref<32x512xbf16, #tpu.memory_space<vmem>>, %arg3: memref<1x512xf32, #tpu.memory_space<vmem>>, %arg4: memref<512x128xbf16, #tpu.memory_space<vmem>>, %arg5: memref<1x128xf32, #tpu.memory_space<vmem>>, %arg6: memref<128x512xbf16, #tpu.memory_space<vmem>>, %arg7: memref<1x512xf32, #tpu.memory_space<vmem>>, %arg8: memref<512x128xbf16, #tpu.memory_space<vmem>>, %arg9: memref<1x128xf32, #tpu.memory_space<vmem>>, %arg10: memref<128x128xbf16, #tpu.memory_space<vmem>>, %arg11: memref<128x128xbf16, #tpu.memory_space<vmem>>) attributes {dimension_semantics = [#tpu.dimension_semantics<parallel>], iteration_bounds = array<i64: 2>, scalar_prefetch = 0 : i64, scratch_operands = 0 : i64, tpu.core_type = #tpu.core_type<tc>, window_params = [{transform_indices = @transform_0, window_bounds = array<i64: 128, 32>}, {pipeline_mode = #tpu.pipeline_mode<synchronous>, transform_indices = @transform_1, window_bounds = array<i64: 32, 512>}, {pipeline_mode = #tpu.pipeline_mode<synchronous>, transform_indices = @transform_2, window_bounds = array<i64: 1, 512>}, {pipeline_mode = #tpu.pipeline_mode<synchronous>, transform_indices = @transform_3, window_bounds = array<i64: 512, 128>}, {pipeline_mode = #tpu.pipeline_mode<synchronous>, transform_indices = @transform_4, window_bounds = array<i64: 1, 128>}, {pipeline_mode = #tpu.pipeline_mode<synchronous>, transform_indices = @transform_5, window_bounds = array<i64: 128, 512>}, {pipeline_mode = #tpu.pipeline_mode<synchronous>, transform_indices = @transform_6, window_bounds = array<i64: 1, 512>}, {pipeline_mode = #tpu.pipeline_mode<synchronous>, transform_indices = @transform_7, window_bounds = array<i64: 512, 128>}, {pipeline_mode = #tpu.pipeline_mode<synchronous>, transform_indices = @transform_8, window_bounds = array<i64: 1, 128>}, {transform_indices = @transform_9, window_bounds = array<i64: 128, 128>}, {transform_indices = @transform_10, window_bounds = array<i64: 128, 128>}]} {
    %c0 = arith.constant 0 : index
    %c0_0 = arith.constant 0 : index
    %0 = vector.load %arg1[%c0, %c0_0] : memref<128x32xf32, #tpu.memory_space<vmem>>, vector<128x32xf32>
    %1 = arith.truncf %0 : vector<128x32xf32> to vector<128x32xbf16>
    %c0_1 = arith.constant 0 : index
    %c0_2 = arith.constant 0 : index
    %2 = vector.load %arg2[%c0_1, %c0_2] : memref<32x512xbf16, #tpu.memory_space<vmem>>, vector<32x512xbf16>
    %cst = arith.constant dense<0.000000e+00> : vector<128x512xf32>
    %3 = tpu.matmul %1, %2, %cst {dimension_numbers = #tpu.dot_dimension_numbers<[1], [0], [0], [1], [0, 0, 1, 1], [], []>} : vector<128x32xbf16>, vector<32x512xbf16>, vector<128x512xf32> -> vector<128x512xf32>
    %c0_3 = arith.constant 0 : index
    %c0_4 = arith.constant 0 : index
    %4 = vector.load %arg3[%c0_3, %c0_4] : memref<1x512xf32, #tpu.memory_space<vmem>>, vector<1x512xf32>
    %5 = vector.broadcast %4 : vector<1x512xf32> to vector<128x512xf32>
    %6 = arith.addf %3, %5 : vector<128x512xf32>
    %cst_5 = arith.constant 0.000000e+00 : f32
    %7 = vector.broadcast %cst_5 : f32 to vector<128x512xf32>
    %8 = arith.maximumf %6, %7 : vector<128x512xf32>
    %9 = arith.truncf %8 : vector<128x512xf32> to vector<128x512xbf16>
    %c0_6 = arith.constant 0 : index
    %c0_7 = arith.constant 0 : index
    %10 = vector.load %arg4[%c0_6, %c0_7] : memref<512x128xbf16, #tpu.memory_space<vmem>>, vector<512x128xbf16>
    %cst_8 = arith.constant dense<0.000000e+00> : vector<128x128xf32>
    %11 = tpu.matmul %9, %10, %cst_8 {dimension_numbers = #tpu.dot_dimension_numbers<[1], [0], [0], [1], [0, 0, 1, 1], [], []>} : vector<128x512xbf16>, vector<512x128xbf16>, vector<128x128xf32> -> vector<128x128xf32>
    %c0_9 = arith.constant 0 : index
    %c0_10 = arith.constant 0 : index
    %12 = vector.load %arg5[%c0_9, %c0_10] : memref<1x128xf32, #tpu.memory_space<vmem>>, vector<1x128xf32>
    %13 = vector.broadcast %12 : vector<1x128xf32> to vector<128x128xf32>
    %14 = arith.addf %11, %13 : vector<128x128xf32>
    %cst_11 = arith.constant 0.000000e+00 : f32
    %15 = vector.broadcast %cst_11 : f32 to vector<128x128xf32>
    %16 = arith.maximumf %14, %15 : vector<128x128xf32>
    %17 = arith.truncf %16 : vector<128x128xf32> to vector<128x128xbf16>
    %c0_12 = arith.constant 0 : index
    %c0_13 = arith.constant 0 : index
    %18 = vector.load %arg6[%c0_12, %c0_13] : memref<128x512xbf16, #tpu.memory_space<vmem>>, vector<128x512xbf16>
    %cst_14 = arith.constant dense<0.000000e+00> : vector<128x512xf32>
    %19 = tpu.matmul %17, %18, %cst_14 {dimension_numbers = #tpu.dot_dimension_numbers<[1], [0], [0], [1], [0, 0, 1, 1], [], []>} : vector<128x128xbf16>, vector<128x512xbf16>, vector<128x512xf32> -> vector<128x512xf32>
    %c0_15 = arith.constant 0 : index
    %c0_16 = arith.constant 0 : index
    %20 = vector.load %arg7[%c0_15, %c0_16] : memref<1x512xf32, #tpu.memory_space<vmem>>, vector<1x512xf32>
    %21 = vector.broadcast %20 : vector<1x512xf32> to vector<128x512xf32>
    %22 = arith.addf %19, %21 : vector<128x512xf32>
    %cst_17 = arith.constant 0.000000e+00 : f32
    %23 = vector.broadcast %cst_17 : f32 to vector<128x512xf32>
    %24 = arith.maximumf %22, %23 : vector<128x512xf32>
    %25 = arith.truncf %24 : vector<128x512xf32> to vector<128x512xbf16>
    %c0_18 = arith.constant 0 : index
    %c0_19 = arith.constant 0 : index
    %26 = vector.load %arg8[%c0_18, %c0_19] : memref<512x128xbf16, #tpu.memory_space<vmem>>, vector<512x128xbf16>
    %cst_20 = arith.constant dense<0.000000e+00> : vector<128x128xf32>
    %27 = tpu.matmul %25, %26, %cst_20 {dimension_numbers = #tpu.dot_dimension_numbers<[1], [0], [0], [1], [0, 0, 1, 1], [], []>} : vector<128x512xbf16>, vector<512x128xbf16>, vector<128x128xf32> -> vector<128x128xf32>
    %c0_21 = arith.constant 0 : index
    %c0_22 = arith.constant 0 : index
    %28 = vector.load %arg9[%c0_21, %c0_22] : memref<1x128xf32, #tpu.memory_space<vmem>>, vector<1x128xf32>
    %29 = vector.broadcast %28 : vector<1x128xf32> to vector<128x128xf32>
    %30 = arith.addf %27, %29 : vector<128x128xf32>
    %31 = arith.negf %30 : vector<128x128xf32>
    %32 = math.exp %31 : vector<128x128xf32>
    %cst_23 = arith.constant 1.000000e+00 : f32
    %33 = vector.broadcast %cst_23 : f32 to vector<128x128xf32>
    %34 = arith.addf %33, %32 : vector<128x128xf32>
    %35 = arith.divf %33, %34 : vector<128x128xf32>
    %36 = arith.truncf %16 : vector<128x128xf32> to vector<128x128xbf16>
    %c0_24 = arith.constant 0 : index
    %c0_25 = arith.constant 0 : index
    %37 = vector.load %arg10[%c0_24, %c0_25] : memref<128x128xbf16, #tpu.memory_space<vmem>>, vector<128x128xbf16>
    tpu.vector_store %arg10[%c0_24, %c0_25], %36 {strides = array<i32>} : memref<128x128xbf16, #tpu.memory_space<vmem>>, vector<128x128xbf16>,
    %38 = arith.truncf %35 : vector<128x128xf32> to vector<128x128xbf16>
    %c0_26 = arith.constant 0 : index
    %c0_27 = arith.constant 0 : index
    %39 = vector.load %arg11[%c0_26, %c0_27] : memref<128x128xbf16, #tpu.memory_space<vmem>>, vector<128x128xbf16>
    tpu.vector_store %arg11[%c0_26, %c0_27], %38 {strides = array<i32>} : memref<128x128xbf16, #tpu.memory_space<vmem>>, vector<128x128xbf16>,
    return
  }
  func.func @transform_0(%arg0: i32) -> (i32, i32) {
    %c0_i32 = arith.constant 0 : i32
    %c0_i32_0 = arith.constant 0 : i32
    return %arg0, %c0_i32 : i32, i32
  }
  func.func @transform_1(%arg0: i32) -> (i32, i32) {
    %c0_i32 = arith.constant 0 : i32
    %c0_i32_0 = arith.constant 0 : i32
    %c0_i32_1 = arith.constant 0 : i32
    return %c0_i32, %c0_i32_0 : i32, i32
  }
  func.func @transform_2(%arg0: i32) -> (i32, i32) {
    %c0_i32 = arith.constant 0 : i32
    %c0_i32_0 = arith.constant 0 : i32
    %c0_i32_1 = arith.constant 0 : i32
    return %c0_i32, %c0_i32_0 : i32, i32
  }
  func.func @transform_3(%arg0: i32) -> (i32, i32) {
    %c0_i32 = arith.constant 0 : i32
    %c0_i32_0 = arith.constant 0 : i32
    %c0_i32_1 = arith.constant 0 : i32
    return %c0_i32, %c0_i32_0 : i32, i32
  }
  func.func @transform_4(%arg0: i32) -> (i32, i32) {
    %c0_i32 = arith.constant 0 : i32
    %c0_i32_0 = arith.constant 0 : i32
    %c0_i32_1 = arith.constant 0 : i32
    return %c0_i32, %c0_i32_0 : i32, i32
  }
  func.func @transform_5(%arg0: i32) -> (i32, i32) {
    %c0_i32 = arith.constant 0 : i32
    %c0_i32_0 = arith.constant 0 : i32
    %c0_i32_1 = arith.constant 0 : i32
    return %c0_i32, %c0_i32_0 : i32, i32
  }
  func.func @transform_6(%arg0: i32) -> (i32, i32) {
    %c0_i32 = arith.constant 0 : i32
    %c0_i32_0 = arith.constant 0 : i32
    %c0_i32_1 = arith.constant 0 : i32
    return %c0_i32, %c0_i32_0 : i32, i32
  }
  func.func @transform_7(%arg0: i32) -> (i32, i32) {
    %c0_i32 = arith.constant 0 : i32
    %c0_i32_0 = arith.constant 0 : i32
    %c0_i32_1 = arith.constant 0 : i32
    return %c0_i32, %c0_i32_0 : i32, i32
  }
  func.func @transform_8(%arg0: i32) -> (i32, i32) {
    %c0_i32 = arith.constant 0 : i32
    %c0_i32_0 = arith.constant 0 : i32
    %c0_i32_1 = arith.constant 0 : i32
    return %c0_i32, %c0_i32_0 : i32, i32
  }
  func.func @transform_9(%arg0: i32) -> (i32, i32) {
    %c0_i32 = arith.constant 0 : i32
    %c0_i32_0 = arith.constant 0 : i32
    return %arg0, %c0_i32 : i32, i32
  }
  func.func @transform_10(%arg0: i32) -> (i32, i32) {
    %c0_i32 = arith.constant 0 : i32
    %c0_i32_0 = arith.constant 0 : i32
    return %arg0, %c0_i32 : i32, i32
  }
}

</mosaic_0001>

<llo_original>
// kernel: autoencoder_forward.1
$region0: #{autoencoder_forward.1}
  #allocation0 [shape = 'u32[]', space=smem, size = 0x4, offset = 0x4, fixed_abs, tag = 'smem constant byte address 0x4 - core index']
  #allocation1 [shape = 'u32[144,128]{1,0:T(1,128)}', space=vmem, size = 0x12000, scoped, tag = 'internal scratch']
  %s0 = inlined_call_operand.vmem [shape: f32[256,32], index: 0, kind: input, shape index: {}]
  %s1 = inlined_call_operand.vmem [shape: bf16[32,512], index: 1, kind: input, shape index: {}]
  %s2 = inlined_call_operand.vmem [shape: f32[1,512], index: 2, kind: input, shape index: {}]
  %s3 = inlined_call_operand.vmem [shape: bf16[512,128], index: 3, kind: input, shape index: {}]
  %s4 = inlined_call_operand.vmem [shape: f32[1,128], index: 4, kind: input, shape index: {}]
  %s5 = inlined_call_operand.hbm [shape: bf16[128,512], index: 5, kind: input, shape index: {}]
  %s6 = inlined_call_operand.vmem [shape: f32[1,512], index: 6, kind: input, shape index: {}]
  %s7 = inlined_call_operand.hbm [shape: bf16[512,128], index: 7, kind: input, shape index: {}]
  %s8 = inlined_call_operand.vmem [shape: f32[1,128], index: 8, kind: input, shape index: {}]
  %s9 = inlined_call_operand.vmem [shape: bf16[256,128], index: 9, kind: output, shape index: {0}]
  %s10 = inlined_call_operand.vmem [shape: bf16[256,128], index: 10, kind: output, shape index: {1}]
  %11 = xla_tuple %s9, %s10
  %s12 = sld [smem:[#allocation0]]
  $region85: #{autoencoder_forward.1} parent=0
    _
  %s14 = ssub.s32 1, %s12
  %s15 = scalar_select 0, %s14, %s12
  $region1: #{autoencoder_forward.1} parent=0
    #allocation2 [shape = 'u8[131072]{0}', space=vmem, size = 0x20000, scoped, tag = 'input window, operand 5, single buffered']
    #allocation3 [shape = 's32[2]{0}', space=sflag, size = 0x8, scoped, tag = 'scoped memory for autoencoder_forward.1']
    #allocation4 [shape = 'u8[131072]{0}', space=vmem, size = 0x20000, scoped, tag = 'input window, operand 7, single buffered']
    #allocation5 [shape = 's32[1]{0}', space=sflag, size = 0x4, scoped, tag = 'scoped memory for autoencoder_forward.1']
    %16 = vsyncpa [#allocation3], 0
    %17 = vsyncpa [#allocation5], 0
    loop: start=0, step=1, limit=4
    $region2: #{autoencoder_forward.1} parent=1 // loop_pre_header
      _
    $region3: #{autoencoder_forward.1} parent=1 // loop_header
      %s19 = sphi 0, %s23
      %p20 = scmp.ge.s32.totalorder %s19, 4
      %s29 = sphi 0, %s31
      %s32 = sphi 0, %s29
      %s33 = sphi 0, %s32
      %s49 = sphi 0, %s33
      %s53 = sphi 0, %s53
      %s55 = sphi 0, %s53
      %s56 = sphi 0, %s55
      %s70 = sphi 0, %s56
      %s74 = sphi 0, %s74
      %s76 = sphi 0, %s74
      %s77 = sphi 0, %s76
      %s91 = sphi 0, %s77
      %s95 = sphi 0, %s95
      %s97 = sphi 0, %s95
      %s98 = sphi 0, %s97
      %s112 = sphi 0, %s98
      %s116 = sphi 0, %s116
      %s118 = sphi 0, %s116
      %s119 = sphi 0, %s118
      %s133 = sphi 0, %s119
      %s137 = sphi 0, %s137
      %s139 = sphi 0, %s137
      %s140 = sphi 0, %s139
      %s154 = sphi 0, %s140
      %s158 = sphi 0, %s158
      %s160 = sphi 0, %s158
      %s161 = sphi 0, %s160
      %s175 = sphi 0, %s161
      %s179 = sphi 0, %s179
      %s181 = sphi 0, %s179
      %s182 = sphi 0, %s181
      %s196 = sphi 0, %s182
      %s200 = sphi 0, %s200
      %s202 = sphi 0, %s200
      %s203 = sphi 0, %s202
      %s217 = sphi 0, %s203
      %s223 = sphi 0, %s225
      %s226 = sphi 0, %s223
      %s227 = sphi 0, %s226
      %s243 = sphi 0, %s227
      %s249 = sphi 0, %s251
      %s252 = sphi 0, %s249
      %s253 = sphi 0, %s252
      %s269 = sphi 0, %s253
    $region4: #{autoencoder_forward.1} parent=1 // loop_header_branch
      %22 = sbr.rel (%p20) target = $region8
    $region5: #{autoencoder_forward.1} parent=1 // loop_body
      %s24 = ssub.s32 %s19, 1
      %s25 = ssub.s32 %s19, 2
      %s26 = sadd.s32 %s19, 1
      %s27 = ssub.s32 %s19, %s26
      %p28 = scmp.eq.s32.totalorder %s27, 0
      %s30 = sadd.s32 %s29, 1
      %s31 = scalar_select %p28, %s29, %s30
      %p34 = pneg %p28
      %p35 = scmp.eq.s32.totalorder %s19, 1
      %p36 = por %p34, %p35
      %p37 = scmp.ne.s32.totalorder %s29, %s32
      %p38 = scmp.eq.s32.totalorder %s19, 0
      %p39 = por %p37, %p38
      %p40 = scmp.ne.s32.totalorder %s29, %s32
      %p41 = scmp.eq.s32.totalorder %s24, 1
      %p42 = por %p40, %p41
      %p43 = scmp.ne.s32.totalorder %s32, %s33
      %p44 = scmp.eq.s32.totalorder %s24, 0
      %p45 = por %p43, %p44
      %p46 = scmp.ne.s32.totalorder %s32, %s33
      %p47 = scmp.eq.s32.totalorder %s25, 1
      %p48 = por %p46, %p47
      %p50 = scmp.ne.s32.totalorder %s33, %s49
      %p51 = scmp.eq.s32.totalorder %s25, 0
      %p52 = por %p50, %p51
      %s54 = sadd.s32 %s53, 1
      %p57 = scmp.eq.s32.totalorder %s19, 1
      %p58 = scmp.ne.s32.totalorder %s53, %s55
      %p59 = scmp.eq.s32.totalorder %s19, 0
      %p60 = por %p58, %p59
      %p61 = scmp.ne.s32.totalorder %s53, %s55
      %p62 = scmp.eq.s32.totalorder %s24, 1
      %p63 = por %p61, %p62
      %p64 = scmp.ne.s32.totalorder %s55, %s56
      %p65 = scmp.eq.s32.totalorder %s24, 0
      %p66 = por %p64, %p65
      %p67 = scmp.ne.s32.totalorder %s55, %s56
      %p68 = scmp.eq.s32.totalorder %s25, 1
      %p69 = por %p67, %p68
      %p71 = scmp.ne.s32.totalorder %s56, %s70
      %p72 = scmp.eq.s32.totalorder %s25, 0
      %p73 = por %p71, %p72
      %s75 = sadd.s32 %s74, 1
      %p78 = scmp.eq.s32.totalorder %s19, 1
      %p79 = scmp.ne.s32.totalorder %s74, %s76
      %p80 = scmp.eq.s32.totalorder %s19, 0
      %p81 = por %p79, %p80
      %p82 = scmp.ne.s32.totalorder %s74, %s76
      %p83 = scmp.eq.s32.totalorder %s24, 1
      %p84 = por %p82, %p83
      %p85 = scmp.ne.s32.totalorder %s76, %s77
      %p86 = scmp.eq.s32.totalorder %s24, 0
      %p87 = por %p85, %p86
      %p88 = scmp.ne.s32.totalorder %s76, %s77
      %p89 = scmp.eq.s32.totalorder %s25, 1
      %p90 = por %p88, %p89
      %p92 = scmp.ne.s32.totalorder %s77, %s91
      %p93 = scmp.eq.s32.totalorder %s25, 0
      %p94 = por %p92, %p93
      %s96 = sadd.s32 %s95, 1
      %p99 = scmp.eq.s32.totalorder %s19, 1
      %p100 = scmp.ne.s32.totalorder %s95, %s97
      %p101 = scmp.eq.s32.totalorder %s19, 0
      %p102 = por %p100, %p101
      %p103 = scmp.ne.s32.totalorder %s95, %s97
      %p104 = scmp.eq.s32.totalorder %s24, 1
      %p105 = por %p103, %p104
      %p106 = scmp.ne.s32.totalorder %s97, %s98
      %p107 = scmp.eq.s32.totalorder %s24, 0
      %p108 = por %p106, %p107
      %p109 = scmp.ne.s32.totalorder %s97, %s98
      %p110 = scmp.eq.s32.totalorder %s25, 1
      %p111 = por %p109, %p110
      %p113 = scmp.ne.s32.totalorder %s98, %s112
      %p114 = scmp.eq.s32.totalorder %s25, 0
      %p115 = por %p113, %p114
      %s117 = sadd.s32 %s116, 1
      %p120 = scmp.eq.s32.totalorder %s19, 1
      %p121 = scmp.ne.s32.totalorder %s116, %s118
      %p122 = scmp.eq.s32.totalorder %s19, 0
      %p123 = por %p121, %p122
      %p124 = scmp.ne.s32.totalorder %s116, %s118
      %p125 = scmp.eq.s32.totalorder %s24, 1
      %p126 = por %p124, %p125
      %p127 = scmp.ne.s32.totalorder %s118, %s119
      %p128 = scmp.eq.s32.totalorder %s24, 0
      %p129 = por %p127, %p128
      %p130 = scmp.ne.s32.totalorder %s118, %s119
      %p131 = scmp.eq.s32.totalorder %s25, 1
      %p132 = por %p130, %p131
      %p134 = scmp.ne.s32.totalorder %s119, %s133
      %p135 = scmp.eq.s32.totalorder %s25, 0
      %p136 = por %p134, %p135
      %s138 = sadd.s32 %s137, 1
      %p141 = scmp.eq.s32.totalorder %s19, 1
      %p142 = scmp.ne.s32.totalorder %s137, %s139
      %p143 = scmp.eq.s32.totalorder %s19, 0
      %p144 = por %p142, %p143
      %p145 = scmp.ne.s32.totalorder %s137, %s139
      %p146 = scmp.eq.s32.totalorder %s24, 1
      %p147 = por %p145, %p146
      %p148 = scmp.ne.s32.totalorder %s139, %s140
      %p149 = scmp.eq.s32.totalorder %s24, 0
      %p150 = por %p148, %p149
      %p151 = scmp.ne.s32.totalorder %s139, %s140
      %p152 = scmp.eq.s32.totalorder %s25, 1
      %p153 = por %p151, %p152
      %p155 = scmp.ne.s32.totalorder %s140, %s154
      %p156 = scmp.eq.s32.totalorder %s25, 0
      %p157 = por %p155, %p156
      %s159 = sadd.s32 %s158, 1
      %p162 = scmp.eq.s32.totalorder %s19, 1
      %p163 = scmp.ne.s32.totalorder %s158, %s160
      %p164 = scmp.eq.s32.totalorder %s19, 0
      %p165 = por %p163, %p164
      %p166 = scmp.ne.s32.totalorder %s158, %s160
      %p167 = scmp.eq.s32.totalorder %s24, 1
      %p168 = por %p166, %p167
      %p169 = scmp.ne.s32.totalorder %s160, %s161
      %p170 = scmp.eq.s32.totalorder %s24, 0
      %p171 = por %p169, %p170
      %p172 = scmp.ne.s32.totalorder %s160, %s161
      %p173 = scmp.eq.s32.totalorder %s25, 1
      %p174 = por %p172, %p173
      %p176 = scmp.ne.s32.totalorder %s161, %s175
      %p177 = scmp.eq.s32.totalorder %s25, 0
      %p178 = por %p176, %p177
      %s180 = sadd.s32 %s179, 1
      %p183 = scmp.eq.s32.totalorder %s19, 1
      %p184 = scmp.ne.s32.totalorder %s179, %s181
      %p185 = scmp.eq.s32.totalorder %s19, 0
      %p186 = por %p184, %p185
      %p187 = scmp.ne.s32.totalorder %s179, %s181
      %p188 = scmp.eq.s32.totalorder %s24, 1
      %p189 = por %p187, %p188
      %p190 = scmp.ne.s32.totalorder %s181, %s182
      %p191 = scmp.eq.s32.totalorder %s24, 0
      %p192 = por %p190, %p191
      %p193 = scmp.ne.s32.totalorder %s181, %s182
      %p194 = scmp.eq.s32.totalorder %s25, 1
      %p195 = por %p193, %p194
      %p197 = scmp.ne.s32.totalorder %s182, %s196
      %p198 = scmp.eq.s32.totalorder %s25, 0
      %p199 = por %p197, %p198
      %s201 = sadd.s32 %s200, 1
      %p204 = scmp.eq.s32.totalorder %s19, 1
      %p205 = scmp.ne.s32.totalorder %s200, %s202
      %p206 = scmp.eq.s32.totalorder %s19, 0
      %p207 = por %p205, %p206
      %p208 = scmp.ne.s32.totalorder %s200, %s202
      %p209 = scmp.eq.s32.totalorder %s24, 1
      %p210 = por %p208, %p209
      %p211 = scmp.ne.s32.totalorder %s202, %s203
      %p212 = scmp.eq.s32.totalorder %s24, 0
      %p213 = por %p211, %p212
      %p214 = scmp.ne.s32.totalorder %s202, %s203
      %p215 = scmp.eq.s32.totalorder %s25, 1
      %p216 = por %p214, %p215
      %p218 = scmp.ne.s32.totalorder %s203, %s217
      %p219 = scmp.eq.s32.totalorder %s25, 0
      %p220 = por %p218, %p219
      %s221 = ssub.s32 %s19, %s26
      %p222 = scmp.eq.s32.totalorder %s221, 0
      %s224 = sadd.s32 %s223, 1
      %s225 = scalar_select %p222, %s223, %s224
      %p228 = pneg %p222
      %p229 = scmp.eq.s32.totalorder %s19, 1
      %p230 = por %p228, %p229
      %p231 = scmp.ne.s32.totalorder %s223, %s226
      %p232 = scmp.eq.s32.totalorder %s19, 0
      %p233 = por %p231, %p232
      %p234 = scmp.ne.s32.totalorder %s223, %s226
      %p235 = scmp.eq.s32.totalorder %s24, 1
      %p236 = por %p234, %p235
      %p237 = scmp.ne.s32.totalorder %s226, %s227
      %p238 = scmp.eq.s32.totalorder %s24, 0
      %p239 = por %p237, %p238
      %p240 = scmp.ne.s32.totalorder %s226, %s227
      %p241 = scmp.eq.s32.totalorder %s25, 1
      %p242 = por %p240, %p241
      %p244 = scmp.ne.s32.totalorder %s227, %s243
      %p245 = scmp.eq.s32.totalorder %s25, 0
      %p246 = por %p244, %p245
      %s247 = ssub.s32 %s19, %s26
      %p248 = scmp.eq.s32.totalorder %s247, 0
      %s250 = sadd.s32 %s249, 1
      %s251 = scalar_select %p248, %s249, %s250
      %p254 = pneg %p248
      %p255 = scmp.eq.s32.totalorder %s19, 1
      %p256 = por %p254, %p255
      %p257 = scmp.ne.s32.totalorder %s249, %s252
      %p258 = scmp.eq.s32.totalorder %s19, 0
      %p259 = por %p257, %p258
      %p260 = scmp.ne.s32.totalorder %s249, %s252
      %p261 = scmp.eq.s32.totalorder %s24, 1
      %p262 = por %p260, %p261
      %p263 = scmp.ne.s32.totalorder %s252, %s253
      %p264 = scmp.eq.s32.totalorder %s24, 0
      %p265 = por %p263, %p264
      %p266 = scmp.ne.s32.totalorder %s252, %s253
      %p267 = scmp.eq.s32.totalorder %s25, 1
      %p268 = por %p266, %p267
      %p270 = scmp.ne.s32.totalorder %s253, %s269
      %p271 = scmp.eq.s32.totalorder %s25, 0
      %p272 = por %p270, %p271
      %p273 = scmp.le.s32.totalorder 1, %s19
      %p274 = scmp.lt.s32.totalorder %s19, 3
      %p275 = pnand %p273, %p274
      %p276 = pneg %p275
      // Predicated region
      $region9: #{autoencoder_forward.1} parent=5 // pred_check
        _
      $region10: #{autoencoder_forward.1} parent=5 // pred_check_branch
        %278 = sbr.rel (%p275) target = $region12
      $region11: #{autoencoder_forward.1} parent=5 // pred_region
        %s279 = ssub.s32 %s19, 1
        // Predicated region
        $region13: #{autoencoder_forward.1} parent=11 // pred_check
          %p280 = pneg %p66
        $region14: #{autoencoder_forward.1} parent=11 // pred_check_branch
          %282 = sbr.rel (%p280) target = $region16
        $region15: #{autoencoder_forward.1} parent=11 // pred_region
          _
        $region16: #{autoencoder_forward.1} parent=11 // pred_fallthru
          _
        // Predicated region
        $region17: #{autoencoder_forward.1} parent=11 // pred_check
          %p283 = pneg %p87
        $region18: #{autoencoder_forward.1} parent=11 // pred_check_branch
          %285 = sbr.rel (%p283) target = $region20
        $region19: #{autoencoder_forward.1} parent=11 // pred_region
          _
        $region20: #{autoencoder_forward.1} parent=11 // pred_fallthru
          _
        // Predicated region
        $region21: #{autoencoder_forward.1} parent=11 // pred_check
          %p286 = pneg %p108
        $region22: #{autoencoder_forward.1} parent=11 // pred_check_branch
          %288 = sbr.rel (%p286) target = $region24
        $region23: #{autoencoder_forward.1} parent=11 // pred_region
          _
        $region24: #{autoencoder_forward.1} parent=11 // pred_fallthru
          _
        // Predicated region
        $region25: #{autoencoder_forward.1} parent=11 // pred_check
          %p289 = pneg %p129
        $region26: #{autoencoder_forward.1} parent=11 // pred_check_branch
          %291 = sbr.rel (%p289) target = $region28
        $region27: #{autoencoder_forward.1} parent=11 // pred_region
          _
        $region28: #{autoencoder_forward.1} parent=11 // pred_fallthru
          _
        // Predicated region
        $region29: #{autoencoder_forward.1} parent=11 // pred_check
          %p292 = pneg %p150
        $region30: #{autoencoder_forward.1} parent=11 // pred_check_branch
          %294 = sbr.rel (%p292) target = $region32
        $region31: #{autoencoder_forward.1} parent=11 // pred_region
          %s296 = ssub.s32 4096, 4096
          %297 = vsyncadd [#allocation3], %s296
          %s298 = sshll.u32 [#allocation2], 4
          %s299 = int_to_ptr.vmem [resolvable:$true] %s298
          %304 = dma.hbm_to_vmem [thread:$0]  %s5, 4096, %s299, [#allocation3], 256, 256, 16
        $region32: #{autoencoder_forward.1} parent=11 // pred_fallthru
          _
        // Predicated region
        $region33: #{autoencoder_forward.1} parent=11 // pred_check
          %p305 = pneg %p171
        $region34: #{autoencoder_forward.1} parent=11 // pred_check_branch
          %307 = sbr.rel (%p305) target = $region36
        $region35: #{autoencoder_forward.1} parent=11 // pred_region
          _
        $region36: #{autoencoder_forward.1} parent=11 // pred_fallthru
          _
        // Predicated region
        $region37: #{autoencoder_forward.1} parent=11 // pred_check
          %p308 = pneg %p192
        $region38: #{autoencoder_forward.1} parent=11 // pred_check_branch
          %310 = sbr.rel (%p308) target = $region40
        $region39: #{autoencoder_forward.1} parent=11 // pred_region
          %s312 = ssub.s32 4096, 4096
          %313 = vsyncadd [#allocation5], %s312
          %s314 = sshll.u32 [#allocation4], 4
          %s315 = int_to_ptr.vmem [resolvable:$true] %s314
          %320 = dma.hbm_to_vmem [thread:$0]  %s7, 4096, %s315, [#allocation5], 64, 64, 4
        $region40: #{autoencoder_forward.1} parent=11 // pred_fallthru
          _
        // Predicated region
        $region41: #{autoencoder_forward.1} parent=11 // pred_check
          %p321 = pneg %p213
        $region42: #{autoencoder_forward.1} parent=11 // pred_check_branch
          %323 = sbr.rel (%p321) target = $region44
        $region43: #{autoencoder_forward.1} parent=11 // pred_region
          _
        $region44: #{autoencoder_forward.1} parent=11 // pred_fallthru
          _
      $region12: #{autoencoder_forward.1} parent=5 // pred_fallthru
        _
      %p324 = scmp.lt.s32.totalorder %s19, 2
      // Predicated region
      $region45: #{autoencoder_forward.1} parent=5 // pred_check
        %p325 = pneg %p324
      $region46: #{autoencoder_forward.1} parent=5 // pred_check_branch
        %327 = sbr.rel (%p325) target = $region48
      $region47: #{autoencoder_forward.1} parent=5 // pred_region
        // Predicated region
        $region49: #{autoencoder_forward.1} parent=47 // pred_check
          %p328 = pneg %p39
        $region50: #{autoencoder_forward.1} parent=47 // pred_check_branch
          %330 = sbr.rel (%p328) target = $region52
        $region51: #{autoencoder_forward.1} parent=47 // pred_region
          %s331 = smul.u32 16, %s19
          %p332 = scmp.lt.s32.totalorder %s331, 31
          %s333 = scalar_select %p332, %s331, 31
          %s334 = smul.addr %s333, 8
          %s335 = scalar_lea.vmem %s0, %s334
          %s336 = smul.u32 16, %s19
        $region52: #{autoencoder_forward.1} parent=47 // pred_fallthru
          _
      $region48: #{autoencoder_forward.1} parent=5 // pred_fallthru
        _
      %p337 = scmp.le.s32.totalorder 1, %s19
      %p338 = scmp.lt.s32.totalorder %s19, 3
      %p339 = pnand %p337, %p338
      %p340 = pneg %p339
      // Predicated region
      $region53: #{autoencoder_forward.1} parent=5 // pred_check
        _
      $region54: #{autoencoder_forward.1} parent=5 // pred_check_branch
        %342 = sbr.rel (%p339) target = $region56
      $region55: #{autoencoder_forward.1} parent=5 // pred_region
        %s343 = ssub.s32 %s19, 1
        // Predicated region
        $region57: #{autoencoder_forward.1} parent=55 // pred_check
          %p344 = pneg %p150
        $region58: #{autoencoder_forward.1} parent=55 // pred_check_branch
          %346 = sbr.rel (%p344) target = $region60
        $region59: #{autoencoder_forward.1} parent=55 // pred_region
          %347 = dma.done [#allocation3], 4096
        $region60: #{autoencoder_forward.1} parent=55 // pred_fallthru
          _
        // Predicated region
        $region61: #{autoencoder_forward.1} parent=55 // pred_check
          %p348 = pneg %p192
        $region62: #{autoencoder_forward.1} parent=55 // pred_check_branch
          %350 = sbr.rel (%p348) target = $region64
        $region63: #{autoencoder_forward.1} parent=55 // pred_region
          %351 = dma.done [#allocation5], 4096
        $region64: #{autoencoder_forward.1} parent=55 // pred_fallthru
          _
        %s352 = smul.u32 16, %s24
        %p353 = scmp.lt.s32.totalorder %s352, 31
        %s354 = scalar_select %p353, %s352, 31
        %s355 = smul.addr %s354, 8
        %s356 = scalar_lea.vmem %s0, %s355
        %p357 = pneg %p45
        %p358 = pneg %p42
        %p359 = pneg %p66
        %p360 = pneg %p63
        %p361 = pneg %p87
        %p362 = pneg %p84
        %p363 = pneg %p108
        %p364 = pneg %p105
        %p365 = pneg %p129
        %p366 = pneg %p126
        %p367 = pneg %p150
        %p368 = pneg %p147
        %p369 = pneg %p171
        %p370 = pneg %p168
        %p371 = pneg %p192
        %p372 = pneg %p189
        %p373 = pneg %p213
        %p374 = pneg %p210
        %p375 = pneg %p239
        %p376 = pneg %p236
        %s377 = smul.u32 16, %s24
        %p378 = scmp.lt.s32.totalorder %s377, 31
        %s379 = scalar_select %p378, %s377, 31
        %s380 = smul.addr %s379, 4
        %s381 = scalar_lea.vmem %s9, %s380
        %p382 = pneg %p265
        %p383 = pneg %p262
        %s384 = smul.u32 16, %s24
        %p385 = scmp.lt.s32.totalorder %s384, 31
        %s386 = scalar_select %p385, %s384, 31
        %s387 = smul.addr %s386, 4
        %s388 = scalar_lea.vmem %s10, %s387
        %s389 = smul.u32 16, %s24
        %p390 = scmp.lt.s32.totalorder %s389, 31
        %s391 = scalar_select %p390, %s389, 31
        %s392 = smul.addr %s391, 8
        %s393 = scalar_lea.vmem %s0, %s392
        %s394 = smul.u32 16, %s24
        %s395 = smul.u32 16, %s24
        %p396 = scmp.lt.s32.totalorder %s395, 31
        %s397 = scalar_select %p396, %s395, 31
        %s398 = smul.addr %s397, 4
        %s399 = scalar_lea.vmem %s9, %s398
        %s400 = smul.u32 16, %s24
        %s401 = smul.u32 16, %s24
        %p402 = scmp.lt.s32.totalorder %s401, 31
        %s403 = scalar_select %p402, %s401, 31
        %s404 = smul.addr %s403, 4
        %s405 = scalar_lea.vmem %s10, %s404
        %s406 = smul.u32 16, %s24
        %v408 = vld [vmem:[%s393] sm:$0xff]
        %v409 = vld [vmem:[%s393 + $0x8] sm:$0xff]
        %v410 = vld [vmem:[%s393 + $0x10] sm:$0xff]
        %v411 = vld [vmem:[%s393 + $0x18] sm:$0xff]
        %v412 = vld [vmem:[%s393 + $0x20] sm:$0xff]
        %v413 = vld [vmem:[%s393 + $0x28] sm:$0xff]
        %v414 = vld [vmem:[%s393 + $0x30] sm:$0xff]
        %v415 = vld [vmem:[%s393 + $0x38] sm:$0xff]
        %v416 = vld [vmem:[%s393 + $0x40] sm:$0xff]
        %v417 = vld [vmem:[%s393 + $0x48] sm:$0xff]
        %v418 = vld [vmem:[%s393 + $0x50] sm:$0xff]
        %v419 = vld [vmem:[%s393 + $0x58] sm:$0xff]
        %v420 = vld [vmem:[%s393 + $0x60] sm:$0xff]
        %v421 = vld [vmem:[%s393 + $0x68] sm:$0xff]
        %v422 = vld [vmem:[%s393 + $0x70] sm:$0xff]
        %v423 = vld [vmem:[%s393 + $0x78] sm:$0xff]
        %v424 = vpack.c.bf16 %v409, %v408
        %v425 = vpack.c.bf16 %v411, %v410
        %v426 = vpack.c.bf16 %v413, %v412
        %v427 = vpack.c.bf16 %v415, %v414
        %v428 = vpack.c.bf16 %v417, %v416
        %v429 = vpack.c.bf16 %v419, %v418
        %v430 = vpack.c.bf16 %v421, %v420
        %v431 = vpack.c.bf16 %v423, %v422
        %v432 = vld [vmem:[%s1] sm:$0xff]
        %v433 = vld [vmem:[%s1 + $0x8] sm:$0xff]
        %v434 = vld [vmem:[%s1 + $0x10] sm:$0xff]
        %v435 = vld [vmem:[%s1 + $0x18] sm:$0xff]
        %v436 = vld [vmem:[%s1 + $0x20] sm:$0xff]
        %v437 = vld [vmem:[%s1 + $0x28] sm:$0xff]
        %v438 = vld [vmem:[%s1 + $0x30] sm:$0xff]
        %v439 = vld [vmem:[%s1 + $0x38] sm:$0xff]
        %v440 = vld [vmem:[%s2] sm:$0xf]
        %v442 = vlaneseq
        %v443 = vshrl.u32 %v442, 7
        %v444 = vsub.s32 0, %v443
        %v445 = vrot.slane %v440, %v444
        %v446 = vlaneseq
        %v447 = vshrl.u32 %v446, 7
        %v448 = vsub.s32 1, %v447
        %v449 = vrot.slane %v440, %v448
        %v450 = vlaneseq
        %v451 = vshrl.u32 %v450, 7
        %v452 = vsub.s32 2, %v451
        %v453 = vrot.slane %v440, %v452
        %v454 = vlaneseq
        %v455 = vshrl.u32 %v454, 7
        %v456 = vsub.s32 3, %v455
        %v457 = vrot.slane %v440, %v456
        %v470 = vunpack.c.l.b16 %v432
        %v471 = vunpack.c.h.b16 %v432
        %v472 = vunpack.c.l.b16 %v433
        %v473 = vunpack.c.h.b16 %v433
        %v474 = vunpack.c.l.b16 %v434
        %v475 = vunpack.c.h.b16 %v434
        %v476 = vunpack.c.l.b16 %v435
        %v477 = vunpack.c.h.b16 %v435
        %v478 = vunpack.c.l.b16 %v436
        %v479 = vunpack.c.h.b16 %v436
        %v480 = vunpack.c.l.b16 %v437
        %v481 = vunpack.c.h.b16 %v437
        %v482 = vunpack.c.l.b16 %v438
        %v483 = vunpack.c.h.b16 %v438
        %v484 = vunpack.c.l.b16 %v439
        %v485 = vunpack.c.h.b16 %v439
        %v486 = vpack.c.b16 %v474, %v470
        %v487 = vpack.c.b16 %v475, %v471
        %v488 = vpack.c.b16 %v476, %v472
        %v489 = vpack.c.b16 %v477, %v473
        %v490 = vpack.c.b16 %v482, %v478
        %v491 = vpack.c.b16 %v483, %v479
        %v492 = vpack.c.b16 %v484, %v480
        %v493 = vpack.c.b16 %v485, %v481
        %vm502 = vcmask 261120
        %v504 = vsel %vm502, %v424, 0
        %v507 = vsel %vm502, %v425, 0
        %v510 = vsel %vm502, %v426, 0
        %v513 = vsel %vm502, %v427, 0
        %v516 = vsel %vm502, %v428, 0
        %v519 = vsel %vm502, %v429, 0
        %v522 = vsel %vm502, %v430, 0
        %v525 = vsel %vm502, %v431, 0
        %527 = vmatprep.subr.bf16.mxu0 %v487
        %528 = vmatpush1.bf16.msra.mxu0 %v486
        %529 = vmatprep.subr.bf16.mxu0 %v491
        %530 = vmatpush1.bf16.msra.mxu0 %v490
        %531 = vmatprep.subr.bf16.mxu0 0
        %532 = vmatpush1.bf16.msra.mxu0 0
        %533 = vmatprep.subr.bf16.mxu0 0
        %534 = vmatpush1.bf16.msra.mxu0 0
        %535 = vmatprep.subr.bf16.mxu0 0
        %536 = vmatpush1.bf16.msra.mxu0 0
        %537 = vmatprep.subr.bf16.mxu0 0
        %538 = vmatpush1.bf16.msra.mxu0 0
        %539 = vmatprep.subr.bf16.mxu0 0
        %540 = vmatpush1.bf16.msra.mxu0 0
        %541 = vmatprep.subr.bf16.mxu0 0
        %542 = vmatpush1.bf16.msra.mxu0 0
        %543 = vmatprep.subr.bf16.mxu0 0
        %544 = vmatpush1.bf16.msra.mxu0 0
        %545 = vmatprep.subr.bf16.mxu0 0
        %546 = vmatpush1.bf16.msra.mxu0 0
        %547 = vmatprep.subr.bf16.mxu0 0
        %548 = vmatpush1.bf16.msra.mxu0 0
        %549 = vmatprep.subr.bf16.mxu0 0
        %550 = vmatpush1.bf16.msra.mxu0 0
        %551 = vmatprep.subr.bf16.mxu0 0
        %552 = vmatpush1.bf16.msra.mxu0 0
        %553 = vmatprep.subr.bf16.mxu0 0
        %554 = vmatpush1.bf16.msra.mxu0 0
        %555 = vmatprep.subr.bf16.mxu0 0
        %556 = vmatpush1.bf16.msra.mxu0 0
        %557 = vmatprep.subr.bf16.mxu0 0
        %558 = vmatpush1.bf16.msra.mxu0 0
        %559 = vmatprep.mubr.bf16.mxu0 0
        %560 = vmatmul.mubr.bf16.gmra.mrb[0].mxu0 %v504
        %v561 = vpop.f32.mrb[0].mxu0
        %v562 = vadd.f32 %v445, %v561
        %v563 = vpop.f32.mrb[0].mxu0
        %v564 = vadd.f32 %v449, %v563
        %v565 = vpop.f32.mrb[0].mxu0
        %v566 = vadd.f32 %v445, %v565
        %v567 = vpop.f32.mrb[0].mxu0
        %v568 = vadd.f32 %v449, %v567
        %569 = vmatprep.mubr.bf16.mxu0 0
        %570 = vmatmul.mubr.bf16.gmra.mrb[0].mxu0 %v507
        %v571 = vpop.f32.mrb[0].mxu0
        %v572 = vadd.f32 %v445, %v571
        %v573 = vpop.f32.mrb[0].mxu0
        %v574 = vadd.f32 %v449, %v573
        %v575 = vpop.f32.mrb[0].mxu0
        %v576 = vadd.f32 %v445, %v575
        %v577 = vpop.f32.mrb[0].mxu0
        %v578 = vadd.f32 %v449, %v577
        %579 = vmatprep.mubr.bf16.mxu0 0
        %580 = vmatmul.mubr.bf16.gmra.mrb[0].mxu0 %v510
        %v581 = vpop.f32.mrb[0].mxu0
        %v582 = vadd.f32 %v445, %v581
        %v583 = vpop.f32.mrb[0].mxu0
        %v584 = vadd.f32 %v449, %v583
        %v585 = vpop.f32.mrb[0].mxu0
        %v586 = vadd.f32 %v445, %v585
        %v587 = vpop.f32.mrb[0].mxu0
        %v588 = vadd.f32 %v449, %v587
        %589 = vmatprep.mubr.bf16.mxu0 0
        %590 = vmatmul.mubr.bf16.gmra.mrb[0].mxu0 %v513
        %v591 = vpop.f32.mrb[0].mxu0
        %v592 = vadd.f32 %v445, %v591
        %v593 = vpop.f32.mrb[0].mxu0
        %v594 = vadd.f32 %v449, %v593
        %v595 = vpop.f32.mrb[0].mxu0
        %v596 = vadd.f32 %v445, %v595
        %v597 = vpop.f32.mrb[0].mxu0
        %v598 = vadd.f32 %v449, %v597
        %599 = vmatprep.mubr.bf16.mxu0 0
        %600 = vmatmul.mubr.bf16.gmra.mrb[0].mxu0 %v516
        %v601 = vpop.f32.mrb[0].mxu0
        %v602 = vadd.f32 %v445, %v601
        %v603 = vpop.f32.mrb[0].mxu0
        %v604 = vadd.f32 %v449, %v603
        %v605 = vpop.f32.mrb[0].mxu0
        %v606 = vadd.f32 %v445, %v605
        %v607 = vpop.f32.mrb[0].mxu0
        %v608 = vadd.f32 %v449, %v607
        %609 = vmatprep.mubr.bf16.mxu0 0
        %610 = vmatmul.mubr.bf16.gmra.mrb[0].mxu0 %v519
        %v611 = vpop.f32.mrb[0].mxu0
        %v612 = vadd.f32 %v445, %v611
        %v613 = vpop.f32.mrb[0].mxu0
        %v614 = vadd.f32 %v449, %v613
        %v615 = vpop.f32.mrb[0].mxu0
        %v616 = vadd.f32 %v445, %v615
        %v617 = vpop.f32.mrb[0].mxu0
        %v618 = vadd.f32 %v449, %v617
        %619 = vmatprep.mubr.bf16.mxu0 0
        %620 = vmatmul.mubr.bf16.gmra.mrb[0].mxu0 %v522
        %v621 = vpop.f32.mrb[0].mxu0
        %v622 = vadd.f32 %v445, %v621
        %v623 = vpop.f32.mrb[0].mxu0
        %v624 = vadd.f32 %v449, %v623
        %v625 = vpop.f32.mrb[0].mxu0
        %v626 = vadd.f32 %v445, %v625
        %v627 = vpop.f32.mrb[0].mxu0
        %v628 = vadd.f32 %v449, %v627
        %629 = vmatprep.mubr.bf16.mxu0 0
        %630 = vmatmul.mubr.bf16.gmra.mrb[0].mxu0 %v525
        %v631 = vpop.f32.mrb[0].mxu0
        %v632 = vadd.f32 %v445, %v631
        %v633 = vpop.f32.mrb[0].mxu0
        %v634 = vadd.f32 %v449, %v633
        %v635 = vpop.f32.mrb[0].mxu0
        %v636 = vadd.f32 %v445, %v635
        %v637 = vpop.f32.mrb[0].mxu0
        %v638 = vadd.f32 %v449, %v637
        %639 = vdwg.mxu0
        %640 = vmatprep.subr.bf16.mxu0 %v489
        %641 = vmatpush1.bf16.msra.mxu0 %v488
        %642 = vmatprep.subr.bf16.mxu0 %v493
        %643 = vmatpush1.bf16.msra.mxu0 %v492
        %644 = vmatprep.subr.bf16.mxu0 0
        %645 = vmatpush1.bf16.msra.mxu0 0
        %646 = vmatprep.subr.bf16.mxu0 0
        %647 = vmatpush1.bf16.msra.mxu0 0
        %648 = vmatprep.subr.bf16.mxu0 0
        %649 = vmatpush1.bf16.msra.mxu0 0
        %650 = vmatprep.subr.bf16.mxu0 0
        %651 = vmatpush1.bf16.msra.mxu0 0
        %652 = vmatprep.subr.bf16.mxu0 0
        %653 = vmatpush1.bf16.msra.mxu0 0
        %654 = vmatprep.subr.bf16.mxu0 0
        %655 = vmatpush1.bf16.msra.mxu0 0
        %656 = vmatprep.subr.bf16.mxu0 0
        %657 = vmatpush1.bf16.msra.mxu0 0
        %658 = vmatprep.subr.bf16.mxu0 0
        %659 = vmatpush1.bf16.msra.mxu0 0
        %660 = vmatprep.subr.bf16.mxu0 0
        %661 = vmatpush1.bf16.msra.mxu0 0
        %662 = vmatprep.subr.bf16.mxu0 0
        %663 = vmatpush1.bf16.msra.mxu0 0
        %664 = vmatprep.subr.bf16.mxu0 0
        %665 = vmatpush1.bf16.msra.mxu0 0
        %666 = vmatprep.subr.bf16.mxu0 0
        %667 = vmatpush1.bf16.msra.mxu0 0
        %668 = vmatprep.subr.bf16.mxu0 0
        %669 = vmatpush1.bf16.msra.mxu0 0
        %670 = vmatprep.subr.bf16.mxu0 0
        %671 = vmatpush1.bf16.msra.mxu0 0
        %672 = vmatprep.mubr.bf16.mxu0 0
        %673 = vmatmul.mubr.bf16.gmra.mrb[0].mxu0 %v504
        %v674 = vpop.f32.mrb[0].mxu0
        %v675 = vadd.f32 %v453, %v674
        %v676 = vpop.f32.mrb[0].mxu0
        %v677 = vadd.f32 %v457, %v676
        %v678 = vpop.f32.mrb[0].mxu0
        %v679 = vadd.f32 %v453, %v678
        %v680 = vpop.f32.mrb[0].mxu0
        %v681 = vadd.f32 %v457, %v680
        %682 = vmatprep.mubr.bf16.mxu0 0
        %683 = vmatmul.mubr.bf16.gmra.mrb[0].mxu0 %v507
        %v684 = vpop.f32.mrb[0].mxu0
        %v685 = vadd.f32 %v453, %v684
        %v686 = vpop.f32.mrb[0].mxu0
        %v687 = vadd.f32 %v457, %v686
        %v688 = vpop.f32.mrb[0].mxu0
        %v689 = vadd.f32 %v453, %v688
        %v690 = vpop.f32.mrb[0].mxu0
        %v691 = vadd.f32 %v457, %v690
        %692 = vmatprep.mubr.bf16.mxu0 0
        %693 = vmatmul.mubr.bf16.gmra.mrb[0].mxu0 %v510
        %v694 = vpop.f32.mrb[0].mxu0
        %v695 = vadd.f32 %v453, %v694
        %v696 = vpop.f32.mrb[0].mxu0
        %v697 = vadd.f32 %v457, %v696
        %v698 = vpop.f32.mrb[0].mxu0
        %v699 = vadd.f32 %v453, %v698
        %v700 = vpop.f32.mrb[0].mxu0
        %v701 = vadd.f32 %v457, %v700
        %702 = vmatprep.mubr.bf16.mxu0 0
        %703 = vmatmul.mubr.bf16.gmra.mrb[0].mxu0 %v513
        %v704 = vpop.f32.mrb[0].mxu0
        %v705 = vadd.f32 %v453, %v704
        %v706 = vpop.f32.mrb[0].mxu0
        %v707 = vadd.f32 %v457, %v706
        %v708 = vpop.f32.mrb[0].mxu0
        %v709 = vadd.f32 %v453, %v708
        %v710 = vpop.f32.mrb[0].mxu0
        %v711 = vadd.f32 %v457, %v710
        %712 = vmatprep.mubr.bf16.mxu0 0
        %713 = vmatmul.mubr.bf16.gmra.mrb[0].mxu0 %v516
        %v714 = vpop.f32.mrb[0].mxu0
        %v715 = vadd.f32 %v453, %v714
        %v716 = vpop.f32.mrb[0].mxu0
        %v717 = vadd.f32 %v457, %v716
        %v718 = vpop.f32.mrb[0].mxu0
        %v719 = vadd.f32 %v453, %v718
        %v720 = vpop.f32.mrb[0].mxu0
        %v721 = vadd.f32 %v457, %v720
        %722 = vmatprep.mubr.bf16.mxu0 0
        %723 = vmatmul.mubr.bf16.gmra.mrb[0].mxu0 %v519
        %v724 = vpop.f32.mrb[0].mxu0
        %v725 = vadd.f32 %v453, %v724
        %v726 = vpop.f32.mrb[0].mxu0
        %v727 = vadd.f32 %v457, %v726
        %v728 = vpop.f32.mrb[0].mxu0
        %v729 = vadd.f32 %v453, %v728
        %v730 = vpop.f32.mrb[0].mxu0
        %v731 = vadd.f32 %v457, %v730
        %732 = vmatprep.mubr.bf16.mxu0 0
        %733 = vmatmul.mubr.bf16.gmra.mrb[0].mxu0 %v522
        %v734 = vpop.f32.mrb[0].mxu0
        %v735 = vadd.f32 %v453, %v734
        %v736 = vpop.f32.mrb[0].mxu0
        %v737 = vadd.f32 %v457, %v736
        %v738 = vpop.f32.mrb[0].mxu0
        %v739 = vadd.f32 %v453, %v738
        %v740 = vpop.f32.mrb[0].mxu0
        %v741 = vadd.f32 %v457, %v740
        %742 = vmatprep.mubr.bf16.mxu0 0
        %743 = vmatmul.mubr.bf16.gmra.mrb[0].mxu0 %v525
        %v744 = vpop.f32.mrb[0].mxu0
        %v745 = vadd.f32 %v453, %v744
        %v746 = vpop.f32.mrb[0].mxu0
        %v747 = vadd.f32 %v457, %v746
        %v748 = vpop.f32.mrb[0].mxu0
        %v749 = vadd.f32 %v453, %v748
        %v750 = vpop.f32.mrb[0].mxu0
        %v751 = vadd.f32 %v457, %v750
        %752 = vdwg.mxu0
        %v753 = vmax.f32 %v562, 0.0
        %v754 = vmax.f32 %v564, 0.0
        %v755 = vmax.f32 %v675, 0.0
        %v756 = vmax.f32 %v677, 0.0
        %v757 = vmax.f32 %v566, 0.0
        %v758 = vmax.f32 %v568, 0.0
        %v759 = vmax.f32 %v679, 0.0
        %v760 = vmax.f32 %v681, 0.0
        %v761 = vmax.f32 %v572, 0.0
        %v762 = vmax.f32 %v574, 0.0
        %v763 = vmax.f32 %v685, 0.0
        %v764 = vmax.f32 %v687, 0.0
        %v765 = vmax.f32 %v576, 0.0
        %v766 = vmax.f32 %v578, 0.0
        %v767 = vmax.f32 %v689, 0.0
        %v768 = vmax.f32 %v691, 0.0
        %v769 = vmax.f32 %v582, 0.0
        %v770 = vmax.f32 %v584, 0.0
        %v771 = vmax.f32 %v695, 0.0
        %v772 = vmax.f32 %v697, 0.0
        %v773 = vmax.f32 %v586, 0.0
        %v774 = vmax.f32 %v588, 0.0
        %v775 = vmax.f32 %v699, 0.0
        %v776 = vmax.f32 %v701, 0.0
        %v777 = vmax.f32 %v592, 0.0
        %v778 = vmax.f32 %v594, 0.0
        %v779 = vmax.f32 %v705, 0.0
        %v780 = vmax.f32 %v707, 0.0
        %v781 = vmax.f32 %v596, 0.0
        %v782 = vmax.f32 %v598, 0.0
        %v783 = vmax.f32 %v709, 0.0
        %v784 = vmax.f32 %v711, 0.0
        %v785 = vmax.f32 %v602, 0.0
        %v786 = vmax.f32 %v604, 0.0
        %v787 = vmax.f32 %v715, 0.0
        %v788 = vmax.f32 %v717, 0.0
        %v789 = vmax.f32 %v606, 0.0
        %v790 = vmax.f32 %v608, 0.0
        %v791 = vmax.f32 %v719, 0.0
        %v792 = vmax.f32 %v721, 0.0
        %v793 = vmax.f32 %v612, 0.0
        %v794 = vmax.f32 %v614, 0.0
        %v795 = vmax.f32 %v725, 0.0
        %v796 = vmax.f32 %v727, 0.0
        %v797 = vmax.f32 %v616, 0.0
        %v798 = vmax.f32 %v618, 0.0
        %v799 = vmax.f32 %v729, 0.0
        %v800 = vmax.f32 %v731, 0.0
        %v801 = vmax.f32 %v622, 0.0
        %v802 = vmax.f32 %v624, 0.0
        %v803 = vmax.f32 %v735, 0.0
        %v804 = vmax.f32 %v737, 0.0
        %v805 = vmax.f32 %v626, 0.0
        %v806 = vmax.f32 %v628, 0.0
        %v807 = vmax.f32 %v739, 0.0
        %v808 = vmax.f32 %v741, 0.0
        %v809 = vmax.f32 %v632, 0.0
        %v810 = vmax.f32 %v634, 0.0
        %v811 = vmax.f32 %v745, 0.0
        %v812 = vmax.f32 %v747, 0.0
        %v813 = vmax.f32 %v636, 0.0
        %v814 = vmax.f32 %v638, 0.0
        %v815 = vmax.f32 %v749, 0.0
        %v816 = vmax.f32 %v751, 0.0
        %v817 = vpack.c.bf16 %v757, %v753
        %v818 = vpack.c.bf16 %v758, %v754
        %v819 = vpack.c.bf16 %v759, %v755
        %v820 = vpack.c.bf16 %v760, %v756
        %v821 = vpack.c.bf16 %v765, %v761
        %v822 = vpack.c.bf16 %v766, %v762
        %v823 = vpack.c.bf16 %v767, %v763
        %v824 = vpack.c.bf16 %v768, %v764
        %v825 = vpack.c.bf16 %v773, %v769
        %v826 = vpack.c.bf16 %v774, %v770
        %v827 = vpack.c.bf16 %v775, %v771
        %v828 = vpack.c.bf16 %v776, %v772
        %v829 = vpack.c.bf16 %v781, %v777
        %v830 = vpack.c.bf16 %v782, %v778
        %v831 = vpack.c.bf16 %v783, %v779
        %v832 = vpack.c.bf16 %v784, %v780
        %v833 = vpack.c.bf16 %v789, %v785
        %v834 = vpack.c.bf16 %v790, %v786
        %v835 = vpack.c.bf16 %v791, %v787
        %v836 = vpack.c.bf16 %v792, %v788
        %v837 = vpack.c.bf16 %v797, %v793
        %v838 = vpack.c.bf16 %v798, %v794
        %v839 = vpack.c.bf16 %v799, %v795
        %v840 = vpack.c.bf16 %v800, %v796
        %v841 = vpack.c.bf16 %v805, %v801
        %v842 = vpack.c.bf16 %v806, %v802
        %v843 = vpack.c.bf16 %v807, %v803
        %v844 = vpack.c.bf16 %v808, %v804
        %v845 = vpack.c.bf16 %v813, %v809
        %v846 = vpack.c.bf16 %v814, %v810
        %v847 = vpack.c.bf16 %v815, %v811
        %v848 = vpack.c.bf16 %v816, %v812
        %v849 = vld [vmem:[%s3] sm:$0xf]
        %v850 = vld [vmem:[%s3 + $0x4] sm:$0xf]
        %v851 = vld [vmem:[%s3 + $0x8] sm:$0xf]
        %v852 = vld [vmem:[%s3 + $0xc] sm:$0xf]
        %v853 = vld [vmem:[%s3 + $0x10] sm:$0xf]
        %v854 = vld [vmem:[%s3 + $0x14] sm:$0xf]
        %v855 = vld [vmem:[%s3 + $0x18] sm:$0xf]
        %v856 = vld [vmem:[%s3 + $0x1c] sm:$0xf]
        %v857 = vld [vmem:[%s3 + $0x20] sm:$0xf]
        %v858 = vld [vmem:[%s3 + $0x24] sm:$0xf]
        %v859 = vld [vmem:[%s3 + $0x28] sm:$0xf]
        %v860 = vld [vmem:[%s3 + $0x2c] sm:$0xf]
        %v861 = vld [vmem:[%s3 + $0x30] sm:$0xf]
        %v862 = vld [vmem:[%s3 + $0x34] sm:$0xf]
        %v863 = vld [vmem:[%s3 + $0x38] sm:$0xf]
        %v864 = vld [vmem:[%s3 + $0x3c] sm:$0xf]
        %v865 = vld [vmem:[%s3 + $0x40] sm:$0xf]
        %v866 = vld [vmem:[%s3 + $0x44] sm:$0xf]
        %v867 = vld [vmem:[%s3 + $0x48] sm:$0xf]
        %v868 = vld [vmem:[%s3 + $0x4c] sm:$0xf]
        %v869 = vld [vmem:[%s3 + $0x50] sm:$0xf]
        %v870 = vld [vmem:[%s3 + $0x54] sm:$0xf]
        %v871 = vld [vmem:[%s3 + $0x58] sm:$0xf]
        %v872 = vld [vmem:[%s3 + $0x5c] sm:$0xf]
        %v873 = vld [vmem:[%s3 + $0x60] sm:$0xf]
        %v874 = vld [vmem:[%s3 + $0x64] sm:$0xf]
        %v875 = vld [vmem:[%s3 + $0x68] sm:$0xf]
        %v876 = vld [vmem:[%s3 + $0x6c] sm:$0xf]
        %v877 = vld [vmem:[%s3 + $0x70] sm:$0xf]
        %v878 = vld [vmem:[%s3 + $0x74] sm:$0xf]
        %v879 = vld [vmem:[%s3 + $0x78] sm:$0xf]
        %v880 = vld [vmem:[%s3 + $0x7c] sm:$0xf]
        %v881 = vld [vmem:[%s3 + $0x80] sm:$0xf]
        %v882 = vld [vmem:[%s3 + $0x84] sm:$0xf]
        %v883 = vld [vmem:[%s3 + $0x88] sm:$0xf]
        %v884 = vld [vmem:[%s3 + $0x8c] sm:$0xf]
        %v885 = vld [vmem:[%s3 + $0x90] sm:$0xf]
        %v886 = vld [vmem:[%s3 + $0x94] sm:$0xf]
        %v887 = vld [vmem:[%s3 + $0x98] sm:$0xf]
        %v888 = vld [vmem:[%s3 + $0x9c] sm:$0xf]
        %v889 = vld [vmem:[%s3 + $0xa0] sm:$0xf]
        %v890 = vld [vmem:[%s3 + $0xa4] sm:$0xf]
        %v891 = vld [vmem:[%s3 + $0xa8] sm:$0xf]
        %v892 = vld [vmem:[%s3 + $0xac] sm:$0xf]
        %v893 = vld [vmem:[%s3 + $0xb0] sm:$0xf]
        %v894 = vld [vmem:[%s3 + $0xb4] sm:$0xf]
        %v895 = vld [vmem:[%s3 + $0xb8] sm:$0xf]
        %v896 = vld [vmem:[%s3 + $0xbc] sm:$0xf]
        %v897 = vld [vmem:[%s3 + $0xc0] sm:$0xf]
        %v898 = vld [vmem:[%s3 + $0xc4] sm:$0xf]
        %v899 = vld [vmem:[%s3 + $0xc8] sm:$0xf]
        %v900 = vld [vmem:[%s3 + $0xcc] sm:$0xf]
        %v901 = vld [vmem:[%s3 + $0xd0] sm:$0xf]
        %v902 = vld [vmem:[%s3 + $0xd4] sm:$0xf]
        %v903 = vld [vmem:[%s3 + $0xd8] sm:$0xf]
        %v904 = vld [vmem:[%s3 + $0xdc] sm:$0xf]
        %v905 = vld [vmem:[%s3 + $0xe0] sm:$0xf]
        %v906 = vld [vmem:[%s3 + $0xe4] sm:$0xf]
        %v907 = vld [vmem:[%s3 + $0xe8] sm:$0xf]
        %v908 = vld [vmem:[%s3 + $0xec] sm:$0xf]
        %v909 = vld [vmem:[%s3 + $0xf0] sm:$0xf]
        %v910 = vld [vmem:[%s3 + $0xf4] sm:$0xf]
        %v911 = vld [vmem:[%s3 + $0xf8] sm:$0xf]
        %v912 = vld [vmem:[%s3 + $0xfc] sm:$0xf]
        %v913 = vld [vmem:[%s4] sm:$0x1]
        %v915 = vlaneseq
        %v916 = vshrl.u32 %v915, 7
        %v917 = vsub.s32 0, %v916
        %v918 = vrot.slane %v913, %v917
        %v984 = vunpack.c.l.b16 %v849
        %v985 = vunpack.c.l.b16 %v850
        %v986 = vunpack.c.l.b16 %v851
        %v987 = vunpack.c.l.b16 %v852
        %v988 = vunpack.c.l.b16 %v853
        %v989 = vunpack.c.l.b16 %v854
        %v990 = vunpack.c.l.b16 %v855
        %v991 = vunpack.c.l.b16 %v856
        %v992 = vunpack.c.l.b16 %v857
        %v993 = vunpack.c.l.b16 %v858
        %v994 = vunpack.c.l.b16 %v859
        %v995 = vunpack.c.l.b16 %v860
        %v996 = vunpack.c.l.b16 %v861
        %v997 = vunpack.c.l.b16 %v862
        %v998 = vunpack.c.l.b16 %v863
        %v999 = vunpack.c.l.b16 %v864
        %v1000 = vunpack.c.l.b16 %v865
        %v1001 = vunpack.c.l.b16 %v866
        %v1002 = vunpack.c.l.b16 %v867
        %v1003 = vunpack.c.l.b16 %v868
        %v1004 = vunpack.c.l.b16 %v869
        %v1005 = vunpack.c.l.b16 %v870
        %v1006 = vunpack.c.l.b16 %v871
        %v1007 = vunpack.c.l.b16 %v872
        %v1008 = vunpack.c.l.b16 %v873
        %v1009 = vunpack.c.l.b16 %v874
        %v1010 = vunpack.c.l.b16 %v875
        %v1011 = vunpack.c.l.b16 %v876
        %v1012 = vunpack.c.l.b16 %v877
        %v1013 = vunpack.c.l.b16 %v878
        %v1014 = vunpack.c.l.b16 %v879
        %v1015 = vunpack.c.l.b16 %v880
        %v1016 = vunpack.c.l.b16 %v881
        %v1017 = vunpack.c.l.b16 %v882
        %v1018 = vunpack.c.l.b16 %v883
        %v1019 = vunpack.c.l.b16 %v884
        %v1020 = vunpack.c.l.b16 %v885
        %v1021 = vunpack.c.l.b16 %v886
        %v1022 = vunpack.c.l.b16 %v887
        %v1023 = vunpack.c.l.b16 %v888
        %v1024 = vunpack.c.l.b16 %v889
        %v1025 = vunpack.c.l.b16 %v890
        %v1026 = vunpack.c.l.b16 %v891
        %v1027 = vunpack.c.l.b16 %v892
        %v1028 = vunpack.c.l.b16 %v893
        %v1029 = vunpack.c.l.b16 %v894
        %v1030 = vunpack.c.l.b16 %v895
        %v1031 = vunpack.c.l.b16 %v896
        %v1032 = vunpack.c.l.b16 %v897
        %v1033 = vunpack.c.l.b16 %v898
        %v1034 = vunpack.c.l.b16 %v899
        %v1035 = vunpack.c.l.b16 %v900
        %v1036 = vunpack.c.l.b16 %v901
        %v1037 = vunpack.c.l.b16 %v902
        %v1038 = vunpack.c.l.b16 %v903
        %v1039 = vunpack.c.l.b16 %v904
        %v1040 = vunpack.c.l.b16 %v905
        %v1041 = vunpack.c.l.b16 %v906
        %v1042 = vunpack.c.l.b16 %v907
        %v1043 = vunpack.c.l.b16 %v908
        %v1044 = vunpack.c.l.b16 %v909
        %v1045 = vunpack.c.l.b16 %v910
        %v1046 = vunpack.c.l.b16 %v911
        %v1047 = vunpack.c.l.b16 %v912
        %v1048 = vpack.c.b16 %v985, %v984
        %v1049 = vpack.c.b16 %v987, %v986
        %v1050 = vpack.c.b16 %v989, %v988
        %v1051 = vpack.c.b16 %v991, %v990
        %v1052 = vpack.c.b16 %v993, %v992
        %v1053 = vpack.c.b16 %v995, %v994
        %v1054 = vpack.c.b16 %v997, %v996
        %v1055 = vpack.c.b16 %v999, %v998
        %v1056 = vpack.c.b16 %v1001, %v1000
        %v1057 = vpack.c.b16 %v1003, %v1002
        %v1058 = vpack.c.b16 %v1005, %v1004
        %v1059 = vpack.c.b16 %v1007, %v1006
        %v1060 = vpack.c.b16 %v1009, %v1008
        %v1061 = vpack.c.b16 %v1011, %v1010
        %v1062 = vpack.c.b16 %v1013, %v1012
        %v1063 = vpack.c.b16 %v1015, %v1014
        %v1064 = vpack.c.b16 %v1017, %v1016
        %v1065 = vpack.c.b16 %v1019, %v1018
        %v1066 = vpack.c.b16 %v1021, %v1020
        %v1067 = vpack.c.b16 %v1023, %v1022
        %v1068 = vpack.c.b16 %v1025, %v1024
        %v1069 = vpack.c.b16 %v1027, %v1026
        %v1070 = vpack.c.b16 %v1029, %v1028
        %v1071 = vpack.c.b16 %v1031, %v1030
        %v1072 = vpack.c.b16 %v1033, %v1032
        %v1073 = vpack.c.b16 %v1035, %v1034
        %v1074 = vpack.c.b16 %v1037, %v1036
        %v1075 = vpack.c.b16 %v1039, %v1038
        %v1076 = vpack.c.b16 %v1041, %v1040
        %v1077 = vpack.c.b16 %v1043, %v1042
        %v1078 = vpack.c.b16 %v1045, %v1044
        %v1079 = vpack.c.b16 %v1047, %v1046
        %1112 = vmatprep.subr.bf16.mxu0 0
        %1113 = vmatpush1.bf16.msra.mxu0 %v1048
        %1114 = vmatprep.subr.bf16.mxu0 0
        %1115 = vmatpush1.bf16.msra.mxu0 %v1049
        %1116 = vmatprep.subr.bf16.mxu0 0
        %1117 = vmatpush1.bf16.msra.mxu0 %v1050
        %1118 = vmatprep.subr.bf16.mxu0 0
        %1119 = vmatpush1.bf16.msra.mxu0 %v1051
        %1120 = vmatprep.subr.bf16.mxu0 0
        %1121 = vmatpush1.bf16.msra.mxu0 %v1052
        %1122 = vmatprep.subr.bf16.mxu0 0
        %1123 = vmatpush1.bf16.msra.mxu0 %v1053
        %1124 = vmatprep.subr.bf16.mxu0 0
        %1125 = vmatpush1.bf16.msra.mxu0 %v1054
        %1126 = vmatprep.subr.bf16.mxu0 0
        %1127 = vmatpush1.bf16.msra.mxu0 %v1055
        %1128 = vmatprep.subr.bf16.mxu0 0
        %1129 = vmatpush1.bf16.msra.mxu0 %v1056
        %1130 = vmatprep.subr.bf16.mxu0 0
        %1131 = vmatpush1.bf16.msra.mxu0 %v1057
        %1132 = vmatprep.subr.bf16.mxu0 0
        %1133 = vmatpush1.bf16.msra.mxu0 %v1058
        %1134 = vmatprep.subr.bf16.mxu0 0
        %1135 = vmatpush1.bf16.msra.mxu0 %v1059
        %1136 = vmatprep.subr.bf16.mxu0 0
        %1137 = vmatpush1.bf16.msra.mxu0 %v1060
        %1138 = vmatprep.subr.bf16.mxu0 0
        %1139 = vmatpush1.bf16.msra.mxu0 %v1061
        %1140 = vmatprep.subr.bf16.mxu0 0
        %1141 = vmatpush1.bf16.msra.mxu0 %v1062
        %1142 = vmatprep.subr.bf16.mxu0 0
        %1143 = vmatpush1.bf16.msra.mxu0 %v1063
        %1144 = vmatprep.mubr.bf16.mxu0 %v818
        %1145 = vmatmul.mubr.bf16.gmra.mrb[0].mxu0 %v817
        %v1146 = vpop.f32.mrb[0].mxu0
        %v1147 = vadd.f32 %v918, %v1146
        %v1148 = vpop.f32.mrb[0].mxu0
        %v1149 = vpop.f32.mrb[0].mxu0
        %v1150 = vadd.f32 %v918, %v1149
        %v1151 = vpop.f32.mrb[0].mxu0
        %1152 = vmatprep.mubr.bf16.mxu0 %v822
        %1153 = vmatmul.mubr.bf16.gmra.mrb[0].mxu0 %v821
        %v1154 = vpop.f32.mrb[0].mxu0
        %v1155 = vadd.f32 %v918, %v1154
        %v1156 = vpop.f32.mrb[0].mxu0
        %v1157 = vpop.f32.mrb[0].mxu0
        %v1158 = vadd.f32 %v918, %v1157
        %v1159 = vpop.f32.mrb[0].mxu0
        %1160 = vmatprep.mubr.bf16.mxu0 %v826
        %1161 = vmatmul.mubr.bf16.gmra.mrb[0].mxu0 %v825
        %v1162 = vpop.f32.mrb[0].mxu0
        %v1163 = vadd.f32 %v918, %v1162
        %v1164 = vpop.f32.mrb[0].mxu0
        %v1165 = vpop.f32.mrb[0].mxu0
        %v1166 = vadd.f32 %v918, %v1165
        %v1167 = vpop.f32.mrb[0].mxu0
        %1168 = vmatprep.mubr.bf16.mxu0 %v830
        %1169 = vmatmul.mubr.bf16.gmra.mrb[0].mxu0 %v829
        %v1170 = vpop.f32.mrb[0].mxu0
        %v1171 = vadd.f32 %v918, %v1170
        %v1172 = vpop.f32.mrb[0].mxu0
        %v1173 = vpop.f32.mrb[0].mxu0
        %v1174 = vadd.f32 %v918, %v1173
        %v1175 = vpop.f32.mrb[0].mxu0
        %1176 = vmatprep.mubr.bf16.mxu0 %v834
        %1177 = vmatmul.mubr.bf16.gmra.mrb[0].mxu0 %v833
        %v1178 = vpop.f32.mrb[0].mxu0
        %v1179 = vadd.f32 %v918, %v1178
        %v1180 = vpop.f32.mrb[0].mxu0
        %v1181 = vpop.f32.mrb[0].mxu0
        %v1182 = vadd.f32 %v918, %v1181
        %v1183 = vpop.f32.mrb[0].mxu0
        %1184 = vmatprep.mubr.bf16.mxu0 %v838
        %1185 = vmatmul.mubr.bf16.gmra.mrb[0].mxu0 %v837
        %v1186 = vpop.f32.mrb[0].mxu0
        %v1187 = vadd.f32 %v918, %v1186
        %v1188 = vpop.f32.mrb[0].mxu0
        %v1189 = vpop.f32.mrb[0].mxu0
        %v1190 = vadd.f32 %v918, %v1189
        %v1191 = vpop.f32.mrb[0].mxu0
        %1192 = vmatprep.mubr.bf16.mxu0 %v842
        %1193 = vmatmul.mubr.bf16.gmra.mrb[0].mxu0 %v841
        %v1194 = vpop.f32.mrb[0].mxu0
        %v1195 = vadd.f32 %v918, %v1194
        %v1196 = vpop.f32.mrb[0].mxu0
        %v1197 = vpop.f32.mrb[0].mxu0
        %v1198 = vadd.f32 %v918, %v1197
        %v1199 = vpop.f32.mrb[0].mxu0
        %1200 = vmatprep.mubr.bf16.mxu0 %v846
        %1201 = vmatmul.mubr.bf16.gmra.mrb[0].mxu0 %v845
        %v1202 = vpop.f32.mrb[0].mxu0
        %v1203 = vadd.f32 %v918, %v1202
        %v1204 = vpop.f32.mrb[0].mxu0
        %v1205 = vpop.f32.mrb[0].mxu0
        %v1206 = vadd.f32 %v918, %v1205
        %v1207 = vpop.f32.mrb[0].mxu0
        %1208 = vdwg.mxu0
        %1209 = vmatprep.subr.bf16.mxu0 0
        %1210 = vmatpush1.bf16.msra.mxu0 %v1064
        %1211 = vmatprep.subr.bf16.mxu0 0
        %1212 = vmatpush1.bf16.msra.mxu0 %v1065
        %1213 = vmatprep.subr.bf16.mxu0 0
        %1214 = vmatpush1.bf16.msra.mxu0 %v1066
        %1215 = vmatprep.subr.bf16.mxu0 0
        %1216 = vmatpush1.bf16.msra.mxu0 %v1067
        %1217 = vmatprep.subr.bf16.mxu0 0
        %1218 = vmatpush1.bf16.msra.mxu0 %v1068
        %1219 = vmatprep.subr.bf16.mxu0 0
        %1220 = vmatpush1.bf16.msra.mxu0 %v1069
        %1221 = vmatprep.subr.bf16.mxu0 0
        %1222 = vmatpush1.bf16.msra.mxu0 %v1070
        %1223 = vmatprep.subr.bf16.mxu0 0
        %1224 = vmatpush1.bf16.msra.mxu0 %v1071
        %1225 = vmatprep.subr.bf16.mxu0 0
        %1226 = vmatpush1.bf16.msra.mxu0 %v1072
        %1227 = vmatprep.subr.bf16.mxu0 0
        %1228 = vmatpush1.bf16.msra.mxu0 %v1073
        %1229 = vmatprep.subr.bf16.mxu0 0
        %1230 = vmatpush1.bf16.msra.mxu0 %v1074
        %1231 = vmatprep.subr.bf16.mxu0 0
        %1232 = vmatpush1.bf16.msra.mxu0 %v1075
        %1233 = vmatprep.subr.bf16.mxu0 0
        %1234 = vmatpush1.bf16.msra.mxu0 %v1076
        %1235 = vmatprep.subr.bf16.mxu0 0
        %1236 = vmatpush1.bf16.msra.mxu0 %v1077
        %1237 = vmatprep.subr.bf16.mxu0 0
        %1238 = vmatpush1.bf16.msra.mxu0 %v1078
        %1239 = vmatprep.subr.bf16.mxu0 0
        %1240 = vmatpush1.bf16.msra.mxu0 %v1079
        %1241 = vmatprep.mubr.bf16.mxu0 %v820
        %1242 = vmatmul.mubr.bf16.gmra.mrb[0].mxu0 %v819
        %v1243 = vpop.f32.mrb[0].mxu0
        %v1244 = vadd.f32 %v1147, %v1243
        %v1245 = vpop.f32.mrb[0].mxu0
        %v1246 = vpop.f32.mrb[0].mxu0
        %v1247 = vadd.f32 %v1150, %v1246
        %v1248 = vpop.f32.mrb[0].mxu0
        %1249 = vmatprep.mubr.bf16.mxu0 %v824
        %1250 = vmatmul.mubr.bf16.gmra.mrb[0].mxu0 %v823
        %v1251 = vpop.f32.mrb[0].mxu0
        %v1252 = vadd.f32 %v1155, %v1251
        %v1253 = vpop.f32.mrb[0].mxu0
        %v1254 = vpop.f32.mrb[0].mxu0
        %v1255 = vadd.f32 %v1158, %v1254
        %v1256 = vpop.f32.mrb[0].mxu0
        %1257 = vmatprep.mubr.bf16.mxu0 %v828
        %1258 = vmatmul.mubr.bf16.gmra.mrb[0].mxu0 %v827
        %v1259 = vpop.f32.mrb[0].mxu0
        %v1260 = vadd.f32 %v1163, %v1259
        %v1261 = vpop.f32.mrb[0].mxu0
        %v1262 = vpop.f32.mrb[0].mxu0
        %v1263 = vadd.f32 %v1166, %v1262
        %v1264 = vpop.f32.mrb[0].mxu0
        %1265 = vmatprep.mubr.bf16.mxu0 %v832
        %1266 = vmatmul.mubr.bf16.gmra.mrb[0].mxu0 %v831
        %v1267 = vpop.f32.mrb[0].mxu0
        %v1268 = vadd.f32 %v1171, %v1267
        %v1269 = vpop.f32.mrb[0].mxu0
        %v1270 = vpop.f32.mrb[0].mxu0
        %v1271 = vadd.f32 %v1174, %v1270
        %v1272 = vpop.f32.mrb[0].mxu0
        %1273 = vmatprep.mubr.bf16.mxu0 %v836
        %1274 = vmatmul.mubr.bf16.gmra.mrb[0].mxu0 %v835
        %v1275 = vpop.f32.mrb[0].mxu0
        %v1276 = vadd.f32 %v1179, %v1275
        %v1277 = vpop.f32.mrb[0].mxu0
        %v1278 = vpop.f32.mrb[0].mxu0
        %v1279 = vadd.f32 %v1182, %v1278
        %v1280 = vpop.f32.mrb[0].mxu0
        %1281 = vmatprep.mubr.bf16.mxu0 %v840
        %1282 = vmatmul.mubr.bf16.gmra.mrb[0].mxu0 %v839
        %v1283 = vpop.f32.mrb[0].mxu0
        %v1284 = vadd.f32 %v1187, %v1283
        %v1285 = vpop.f32.mrb[0].mxu0
        %v1286 = vpop.f32.mrb[0].mxu0
        %v1287 = vadd.f32 %v1190, %v1286
        %v1288 = vpop.f32.mrb[0].mxu0
        %1289 = vmatprep.mubr.bf16.mxu0 %v844
        %1290 = vmatmul.mubr.bf16.gmra.mrb[0].mxu0 %v843
        %v1291 = vpop.f32.mrb[0].mxu0
        %v1292 = vadd.f32 %v1195, %v1291
        %v1293 = vpop.f32.mrb[0].mxu0
        %v1294 = vpop.f32.mrb[0].mxu0
        %v1295 = vadd.f32 %v1198, %v1294
        %v1296 = vpop.f32.mrb[0].mxu0
        %1297 = vmatprep.mubr.bf16.mxu0 %v848
        %1298 = vmatmul.mubr.bf16.gmra.mrb[0].mxu0 %v847
        %v1299 = vpop.f32.mrb[0].mxu0
        %v1300 = vadd.f32 %v1203, %v1299
        %v1301 = vpop.f32.mrb[0].mxu0
        %v1302 = vpop.f32.mrb[0].mxu0
        %v1303 = vadd.f32 %v1206, %v1302
        %v1304 = vpop.f32.mrb[0].mxu0
        %1305 = vdwg.mxu0
        %v1306 = vmax.f32 %v1244, 0.0
        %v1307 = vmax.f32 %v1247, 0.0
        %v1308 = vmax.f32 %v1252, 0.0
        %v1309 = vmax.f32 %v1255, 0.0
        %v1310 = vmax.f32 %v1260, 0.0
        %v1311 = vmax.f32 %v1263, 0.0
        %v1312 = vmax.f32 %v1268, 0.0
        %v1313 = vmax.f32 %v1271, 0.0
        %v1314 = vmax.f32 %v1276, 0.0
        %v1315 = vmax.f32 %v1279, 0.0
        %v1316 = vmax.f32 %v1284, 0.0
        %v1317 = vmax.f32 %v1287, 0.0
        %v1318 = vmax.f32 %v1292, 0.0
        %v1319 = vmax.f32 %v1295, 0.0
        %v1320 = vmax.f32 %v1300, 0.0
        %v1321 = vmax.f32 %v1303, 0.0
        %v1322 = vpack.c.bf16 %v1307, %v1306
        %v1323 = vpack.c.bf16 %v1309, %v1308
        %v1324 = vpack.c.bf16 %v1311, %v1310
        %v1325 = vpack.c.bf16 %v1313, %v1312
        %v1326 = vpack.c.bf16 %v1315, %v1314
        %v1327 = vpack.c.bf16 %v1317, %v1316
        %v1328 = vpack.c.bf16 %v1319, %v1318
        %v1329 = vpack.c.bf16 %v1321, %v1320
        %v1330 = vld [vmem:[#allocation2] sm:$0xff]
        %v1331 = vld [vmem:[#allocation2 + $0x8] sm:$0xff]
        %v1332 = vld [vmem:[#allocation2 + $0x10] sm:$0xff]
        %v1333 = vld [vmem:[#allocation2 + $0x18] sm:$0xff]
        %v1334 = vld [vmem:[#allocation2 + $0x20] sm:$0xff]
        %v1335 = vld [vmem:[#allocation2 + $0x28] sm:$0xff]
        %v1336 = vld [vmem:[#allocation2 + $0x30] sm:$0xff]
        %v1337 = vld [vmem:[#allocation2 + $0x38] sm:$0xff]
        %v1338 = vld [vmem:[#allocation2 + $0x40] sm:$0xff]
        %v1339 = vld [vmem:[#allocation2 + $0x48] sm:$0xff]
        %v1340 = vld [vmem:[#allocation2 + $0x50] sm:$0xff]
        %v1341 = vld [vmem:[#allocation2 + $0x58] sm:$0xff]
        %v1342 = vld [vmem:[#allocation2 + $0x60] sm:$0xff]
        %v1343 = vld [vmem:[#allocation2 + $0x68] sm:$0xff]
        %v1344 = vld [vmem:[#allocation2 + $0x70] sm:$0xff]
        %v1345 = vld [vmem:[#allocation2 + $0x78] sm:$0xff]
        %v1346 = vld [vmem:[#allocation2 + $0x80] sm:$0xff]
        %v1347 = vld [vmem:[#allocation2 + $0x88] sm:$0xff]
        %v1348 = vld [vmem:[#allocation2 + $0x90] sm:$0xff]
        %v1349 = vld [vmem:[#allocation2 + $0x98] sm:$0xff]
        %v1350 = vld [vmem:[#allocation2 + $0xa0] sm:$0xff]
        %v1351 = vld [vmem:[#allocation2 + $0xa8] sm:$0xff]
        %v1352 = vld [vmem:[#allocation2 + $0xb0] sm:$0xff]
        %v1353 = vld [vmem:[#allocation2 + $0xb8] sm:$0xff]
        %v1354 = vld [vmem:[#allocation2 + $0xc0] sm:$0xff]
        %v1355 = vld [vmem:[#allocation2 + $0xc8] sm:$0xff]
        %v1356 = vld [vmem:[#allocation2 + $0xd0] sm:$0xff]
        %v1357 = vld [vmem:[#allocation2 + $0xd8] sm:$0xff]
        %v1358 = vld [vmem:[#allocation2 + $0xe0] sm:$0xff]
        %v1359 = vld [vmem:[#allocation2 + $0xe8] sm:$0xff]
        %v1360 = vld [vmem:[#allocation2 + $0xf0] sm:$0xff]
        %v1361 = vld [vmem:[#allocation2 + $0xf8] sm:$0xff]
        %v1362 = vld [vmem:[%s6] sm:$0xf]
        %v1364 = vlaneseq
        %v1365 = vshrl.u32 %v1364, 7
        %v1366 = vsub.s32 0, %v1365
        %v1367 = vrot.slane %v1362, %v1366
        %v1368 = vlaneseq
        %v1369 = vshrl.u32 %v1368, 7
        %v1370 = vsub.s32 1, %v1369
        %v1371 = vrot.slane %v1362, %v1370
        %v1372 = vlaneseq
        %v1373 = vshrl.u32 %v1372, 7
        %v1374 = vsub.s32 2, %v1373
        %v1375 = vrot.slane %v1362, %v1374
        %v1376 = vlaneseq
        %v1377 = vshrl.u32 %v1376, 7
        %v1378 = vsub.s32 3, %v1377
        %v1379 = vrot.slane %v1362, %v1378
        %v1416 = vunpack.c.l.b16 %v1330
        %v1417 = vunpack.c.h.b16 %v1330
        %v1418 = vunpack.c.l.b16 %v1331
        %v1419 = vunpack.c.h.b16 %v1331
        %v1420 = vunpack.c.l.b16 %v1332
        %v1421 = vunpack.c.h.b16 %v1332
        %v1422 = vunpack.c.l.b16 %v1333
        %v1423 = vunpack.c.h.b16 %v1333
        %v1424 = vunpack.c.l.b16 %v1334
        %v1425 = vunpack.c.h.b16 %v1334
        %v1426 = vunpack.c.l.b16 %v1335
        %v1427 = vunpack.c.h.b16 %v1335
        %v1428 = vunpack.c.l.b16 %v1336
        %v1429 = vunpack.c.h.b16 %v1336
        %v1430 = vunpack.c.l.b16 %v1337
        %v1431 = vunpack.c.h.b16 %v1337
        %v1432 = vunpack.c.l.b16 %v1338
        %v1433 = vunpack.c.h.b16 %v1338
        %v1434 = vunpack.c.l.b16 %v1339
        %v1435 = vunpack.c.h.b16 %v1339
        %v1436 = vunpack.c.l.b16 %v1340
        %v1437 = vunpack.c.h.b16 %v1340
        %v1438 = vunpack.c.l.b16 %v1341
        %v1439 = vunpack.c.h.b16 %v1341
        %v1440 = vunpack.c.l.b16 %v1342
        %v1441 = vunpack.c.h.b16 %v1342
        %v1442 = vunpack.c.l.b16 %v1343
        %v1443 = vunpack.c.h.b16 %v1343
        %v1444 = vunpack.c.l.b16 %v1344
        %v1445 = vunpack.c.h.b16 %v1344
        %v1446 = vunpack.c.l.b16 %v1345
        %v1447 = vunpack.c.h.b16 %v1345
        %v1448 = vunpack.c.l.b16 %v1346
        %v1449 = vunpack.c.h.b16 %v1346
        %v1450 = vunpack.c.l.b16 %v1347
        %v1451 = vunpack.c.h.b16 %v1347
        %v1452 = vunpack.c.l.b16 %v1348
        %v1453 = vunpack.c.h.b16 %v1348
        %v1454 = vunpack.c.l.b16 %v1349
        %v1455 = vunpack.c.h.b16 %v1349
        %v1456 = vunpack.c.l.b16 %v1350
        %v1457 = vunpack.c.h.b16 %v1350
        %v1458 = vunpack.c.l.b16 %v1351
        %v1459 = vunpack.c.h.b16 %v1351
        %v1460 = vunpack.c.l.b16 %v1352
        %v1461 = vunpack.c.h.b16 %v1352
        %v1462 = vunpack.c.l.b16 %v1353
        %v1463 = vunpack.c.h.b16 %v1353
        %v1464 = vunpack.c.l.b16 %v1354
        %v1465 = vunpack.c.h.b16 %v1354
        %v1466 = vunpack.c.l.b16 %v1355
        %v1467 = vunpack.c.h.b16 %v1355
        %v1468 = vunpack.c.l.b16 %v1356
        %v1469 = vunpack.c.h.b16 %v1356
        %v1470 = vunpack.c.l.b16 %v1357
        %v1471 = vunpack.c.h.b16 %v1357
        %v1472 = vunpack.c.l.b16 %v1358
        %v1473 = vunpack.c.h.b16 %v1358
        %v1474 = vunpack.c.l.b16 %v1359
        %v1475 = vunpack.c.h.b16 %v1359
        %v1476 = vunpack.c.l.b16 %v1360
        %v1477 = vunpack.c.h.b16 %v1360
        %v1478 = vunpack.c.l.b16 %v1361
        %v1479 = vunpack.c.h.b16 %v1361
        %v1480 = vpack.c.b16 %v1420, %v1416
        %v1481 = vpack.c.b16 %v1421, %v1417
        %v1482 = vpack.c.b16 %v1422, %v1418
        %v1483 = vpack.c.b16 %v1423, %v1419
        %v1484 = vpack.c.b16 %v1428, %v1424
        %v1485 = vpack.c.b16 %v1429, %v1425
        %v1486 = vpack.c.b16 %v1430, %v1426
        %v1487 = vpack.c.b16 %v1431, %v1427
        %v1488 = vpack.c.b16 %v1436, %v1432
        %v1489 = vpack.c.b16 %v1437, %v1433
        %v1490 = vpack.c.b16 %v1438, %v1434
        %v1491 = vpack.c.b16 %v1439, %v1435
        %v1492 = vpack.c.b16 %v1444, %v1440
        %v1493 = vpack.c.b16 %v1445, %v1441
        %v1494 = vpack.c.b16 %v1446, %v1442
        %v1495 = vpack.c.b16 %v1447, %v1443
        %v1496 = vpack.c.b16 %v1452, %v1448
        %v1497 = vpack.c.b16 %v1453, %v1449
        %v1498 = vpack.c.b16 %v1454, %v1450
        %v1499 = vpack.c.b16 %v1455, %v1451
        %v1500 = vpack.c.b16 %v1460, %v1456
        %v1501 = vpack.c.b16 %v1461, %v1457
        %v1502 = vpack.c.b16 %v1462, %v1458
        %v1503 = vpack.c.b16 %v1463, %v1459
        %v1504 = vpack.c.b16 %v1468, %v1464
        %v1505 = vpack.c.b16 %v1469, %v1465
        %v1506 = vpack.c.b16 %v1470, %v1466
        %v1507 = vpack.c.b16 %v1471, %v1467
        %v1508 = vpack.c.b16 %v1476, %v1472
        %v1509 = vpack.c.b16 %v1477, %v1473
        %v1510 = vpack.c.b16 %v1478, %v1474
        %v1511 = vpack.c.b16 %v1479, %v1475
        %1544 = vmatprep.subr.bf16.mxu0 %v1481
        %1545 = vmatpush1.bf16.msra.mxu0 %v1480
        %1546 = vmatprep.subr.bf16.mxu0 %v1485
        %1547 = vmatpush1.bf16.msra.mxu0 %v1484
        %1548 = vmatprep.subr.bf16.mxu0 %v1489
        %1549 = vmatpush1.bf16.msra.mxu0 %v1488
        %1550 = vmatprep.subr.bf16.mxu0 %v1493
        %1551 = vmatpush1.bf16.msra.mxu0 %v1492
        %1552 = vmatprep.subr.bf16.mxu0 %v1497
        %1553 = vmatpush1.bf16.msra.mxu0 %v1496
        %1554 = vmatprep.subr.bf16.mxu0 %v1501
        %1555 = vmatpush1.bf16.msra.mxu0 %v1500
        %1556 = vmatprep.subr.bf16.mxu0 %v1505
        %1557 = vmatpush1.bf16.msra.mxu0 %v1504
        %1558 = vmatprep.subr.bf16.mxu0 %v1509
        %1559 = vmatpush1.bf16.msra.mxu0 %v1508
        %1560 = vmatprep.subr.bf16.mxu0 0
        %1561 = vmatpush1.bf16.msra.mxu0 0
        %1562 = vmatprep.subr.bf16.mxu0 0
        %1563 = vmatpush1.bf16.msra.mxu0 0
        %1564 = vmatprep.subr.bf16.mxu0 0
        %1565 = vmatpush1.bf16.msra.mxu0 0
        %1566 = vmatprep.subr.bf16.mxu0 0
        %1567 = vmatpush1.bf16.msra.mxu0 0
        %1568 = vmatprep.subr.bf16.mxu0 0
        %1569 = vmatpush1.bf16.msra.mxu0 0
        %1570 = vmatprep.subr.bf16.mxu0 0
        %1571 = vmatpush1.bf16.msra.mxu0 0
        %1572 = vmatprep.subr.bf16.mxu0 0
        %1573 = vmatpush1.bf16.msra.mxu0 0
        %1574 = vmatprep.subr.bf16.mxu0 0
        %1575 = vmatpush1.bf16.msra.mxu0 0
        %1576 = vmatprep.mubr.bf16.mxu0 0
        %1577 = vmatmul.mubr.bf16.gmra.mrb[0].mxu0 %v1322
        %v1578 = vpop.f32.mrb[0].mxu0
        %v1579 = vadd.f32 %v1367, %v1578
        %v1580 = vpop.f32.mrb[0].mxu0
        %v1581 = vadd.f32 %v1371, %v1580
        %v1582 = vpop.f32.mrb[0].mxu0
        %v1583 = vadd.f32 %v1367, %v1582
        %v1584 = vpop.f32.mrb[0].mxu0
        %v1585 = vadd.f32 %v1371, %v1584
        %1586 = vmatprep.mubr.bf16.mxu0 0
        %1587 = vmatmul.mubr.bf16.gmra.mrb[0].mxu0 %v1323
        %v1588 = vpop.f32.mrb[0].mxu0
        %v1589 = vadd.f32 %v1367, %v1588
        %v1590 = vpop.f32.mrb[0].mxu0
        %v1591 = vadd.f32 %v1371, %v1590
        %v1592 = vpop.f32.mrb[0].mxu0
        %v1593 = vadd.f32 %v1367, %v1592
        %v1594 = vpop.f32.mrb[0].mxu0
        %v1595 = vadd.f32 %v1371, %v1594
        %1596 = vmatprep.mubr.bf16.mxu0 0
        %1597 = vmatmul.mubr.bf16.gmra.mrb[0].mxu0 %v1324
        %v1598 = vpop.f32.mrb[0].mxu0
        %v1599 = vadd.f32 %v1367, %v1598
        %v1600 = vpop.f32.mrb[0].mxu0
        %v1601 = vadd.f32 %v1371, %v1600
        %v1602 = vpop.f32.mrb[0].mxu0
        %v1603 = vadd.f32 %v1367, %v1602
        %v1604 = vpop.f32.mrb[0].mxu0
        %v1605 = vadd.f32 %v1371, %v1604
        %1606 = vmatprep.mubr.bf16.mxu0 0
        %1607 = vmatmul.mubr.bf16.gmra.mrb[0].mxu0 %v1325
        %v1608 = vpop.f32.mrb[0].mxu0
        %v1609 = vadd.f32 %v1367, %v1608
        %v1610 = vpop.f32.mrb[0].mxu0
        %v1611 = vadd.f32 %v1371, %v1610
        %v1612 = vpop.f32.mrb[0].mxu0
        %v1613 = vadd.f32 %v1367, %v1612
        %v1614 = vpop.f32.mrb[0].mxu0
        %v1615 = vadd.f32 %v1371, %v1614
        %1616 = vmatprep.mubr.bf16.mxu0 0
        %1617 = vmatmul.mubr.bf16.gmra.mrb[0].mxu0 %v1326
        %v1618 = vpop.f32.mrb[0].mxu0
        %v1619 = vadd.f32 %v1367, %v1618
        %v1620 = vpop.f32.mrb[0].mxu0
        %v1621 = vadd.f32 %v1371, %v1620
        %v1622 = vpop.f32.mrb[0].mxu0
        %v1623 = vadd.f32 %v1367, %v1622
        %v1624 = vpop.f32.mrb[0].mxu0
        %v1625 = vadd.f32 %v1371, %v1624
        %1626 = vmatprep.mubr.bf16.mxu0 0
        %1627 = vmatmul.mubr.bf16.gmra.mrb[0].mxu0 %v1327
        %v1628 = vpop.f32.mrb[0].mxu0
        %v1629 = vadd.f32 %v1367, %v1628
        %v1630 = vpop.f32.mrb[0].mxu0
        %v1631 = vadd.f32 %v1371, %v1630
        %v1632 = vpop.f32.mrb[0].mxu0
        %v1633 = vadd.f32 %v1367, %v1632
        %v1634 = vpop.f32.mrb[0].mxu0
        %v1635 = vadd.f32 %v1371, %v1634
        %1636 = vmatprep.mubr.bf16.mxu0 0
        %1637 = vmatmul.mubr.bf16.gmra.mrb[0].mxu0 %v1328
        %v1638 = vpop.f32.mrb[0].mxu0
        %v1639 = vadd.f32 %v1367, %v1638
        %v1640 = vpop.f32.mrb[0].mxu0
        %v1641 = vadd.f32 %v1371, %v1640
        %v1642 = vpop.f32.mrb[0].mxu0
        %v1643 = vadd.f32 %v1367, %v1642
        %v1644 = vpop.f32.mrb[0].mxu0
        %v1645 = vadd.f32 %v1371, %v1644
        %1646 = vmatprep.mubr.bf16.mxu0 0
        %1647 = vmatmul.mubr.bf16.gmra.mrb[0].mxu0 %v1329
        %v1648 = vpop.f32.mrb[0].mxu0
        %v1649 = vadd.f32 %v1367, %v1648
        %v1650 = vpop.f32.mrb[0].mxu0
        %v1651 = vadd.f32 %v1371, %v1650
        %v1652 = vpop.f32.mrb[0].mxu0
        %v1653 = vadd.f32 %v1367, %v1652
        %v1654 = vpop.f32.mrb[0].mxu0
        %v1655 = vadd.f32 %v1371, %v1654
        %1656 = vdwg.mxu0
        %1657 = vmatprep.subr.bf16.mxu0 %v1483
        %1658 = vmatpush1.bf16.msra.mxu0 %v1482
        %1659 = vmatprep.subr.bf16.mxu0 %v1487
        %1660 = vmatpush1.bf16.msra.mxu0 %v1486
        %1661 = vmatprep.subr.bf16.mxu0 %v1491
        %1662 = vmatpush1.bf16.msra.mxu0 %v1490
        %1663 = vmatprep.subr.bf16.mxu0 %v1495
        %1664 = vmatpush1.bf16.msra.mxu0 %v1494
        %1665 = vmatprep.subr.bf16.mxu0 %v1499
        %1666 = vmatpush1.bf16.msra.mxu0 %v1498
        %1667 = vmatprep.subr.bf16.mxu0 %v1503
        %1668 = vmatpush1.bf16.msra.mxu0 %v1502
        %1669 = vmatprep.subr.bf16.mxu0 %v1507
        %1670 = vmatpush1.bf16.msra.mxu0 %v1506
        %1671 = vmatprep.subr.bf16.mxu0 %v1511
        %1672 = vmatpush1.bf16.msra.mxu0 %v1510
        %1673 = vmatprep.subr.bf16.mxu0 0
        %1674 = vmatpush1.bf16.msra.mxu0 0
        %1675 = vmatprep.subr.bf16.mxu0 0
        %1676 = vmatpush1.bf16.msra.mxu0 0
        %1677 = vmatprep.subr.bf16.mxu0 0
        %1678 = vmatpush1.bf16.msra.mxu0 0
        %1679 = vmatprep.subr.bf16.mxu0 0
        %1680 = vmatpush1.bf16.msra.mxu0 0
        %1681 = vmatprep.subr.bf16.mxu0 0
        %1682 = vmatpush1.bf16.msra.mxu0 0
        %1683 = vmatprep.subr.bf16.mxu0 0
        %1684 = vmatpush1.bf16.msra.mxu0 0
        %1685 = vmatprep.subr.bf16.mxu0 0
        %1686 = vmatpush1.bf16.msra.mxu0 0
        %1687 = vmatprep.subr.bf16.mxu0 0
        %1688 = vmatpush1.bf16.msra.mxu0 0
        %1689 = vmatprep.mubr.bf16.mxu0 0
        %1690 = vmatmul.mubr.bf16.gmra.mrb[0].mxu0 %v1322
        %v1691 = vpop.f32.mrb[0].mxu0
        %v1692 = vadd.f32 %v1375, %v1691
        %v1693 = vpop.f32.mrb[0].mxu0
        %v1694 = vadd.f32 %v1379, %v1693
        %v1695 = vpop.f32.mrb[0].mxu0
        %v1696 = vadd.f32 %v1375, %v1695
        %v1697 = vpop.f32.mrb[0].mxu0
        %v1698 = vadd.f32 %v1379, %v1697
        %1699 = vmatprep.mubr.bf16.mxu0 0
        %1700 = vmatmul.mubr.bf16.gmra.mrb[0].mxu0 %v1323
        %v1701 = vpop.f32.mrb[0].mxu0
        %v1702 = vadd.f32 %v1375, %v1701
        %v1703 = vpop.f32.mrb[0].mxu0
        %v1704 = vadd.f32 %v1379, %v1703
        %v1705 = vpop.f32.mrb[0].mxu0
        %v1706 = vadd.f32 %v1375, %v1705
        %v1707 = vpop.f32.mrb[0].mxu0
        %v1708 = vadd.f32 %v1379, %v1707
        %1709 = vmatprep.mubr.bf16.mxu0 0
        %1710 = vmatmul.mubr.bf16.gmra.mrb[0].mxu0 %v1324
        %v1711 = vpop.f32.mrb[0].mxu0
        %v1712 = vadd.f32 %v1375, %v1711
        %v1713 = vpop.f32.mrb[0].mxu0
        %v1714 = vadd.f32 %v1379, %v1713
        %v1715 = vpop.f32.mrb[0].mxu0
        %v1716 = vadd.f32 %v1375, %v1715
        %v1717 = vpop.f32.mrb[0].mxu0
        %v1718 = vadd.f32 %v1379, %v1717
        %1719 = vmatprep.mubr.bf16.mxu0 0
        %1720 = vmatmul.mubr.bf16.gmra.mrb[0].mxu0 %v1325
        %v1721 = vpop.f32.mrb[0].mxu0
        %v1722 = vadd.f32 %v1375, %v1721
        %v1723 = vpop.f32.mrb[0].mxu0
        %v1724 = vadd.f32 %v1379, %v1723
        %v1725 = vpop.f32.mrb[0].mxu0
        %v1726 = vadd.f32 %v1375, %v1725
        %v1727 = vpop.f32.mrb[0].mxu0
        %v1728 = vadd.f32 %v1379, %v1727
        %1729 = vmatprep.mubr.bf16.mxu0 0
        %1730 = vmatmul.mubr.bf16.gmra.mrb[0].mxu0 %v1326
        %v1731 = vpop.f32.mrb[0].mxu0
        %v1732 = vadd.f32 %v1375, %v1731
        %v1733 = vpop.f32.mrb[0].mxu0
        %v1734 = vadd.f32 %v1379, %v1733
        %v1735 = vpop.f32.mrb[0].mxu0
        %v1736 = vadd.f32 %v1375, %v1735
        %v1737 = vpop.f32.mrb[0].mxu0
        %v1738 = vadd.f32 %v1379, %v1737
        %1739 = vmatprep.mubr.bf16.mxu0 0
        %1740 = vmatmul.mubr.bf16.gmra.mrb[0].mxu0 %v1327
        %v1741 = vpop.f32.mrb[0].mxu0
        %v1742 = vadd.f32 %v1375, %v1741
        %v1743 = vpop.f32.mrb[0].mxu0
        %v1744 = vadd.f32 %v1379, %v1743
        %v1745 = vpop.f32.mrb[0].mxu0
        %v1746 = vadd.f32 %v1375, %v1745
        %v1747 = vpop.f32.mrb[0].mxu0
        %v1748 = vadd.f32 %v1379, %v1747
        %1749 = vmatprep.mubr.bf16.mxu0 0
        %1750 = vmatmul.mubr.bf16.gmra.mrb[0].mxu0 %v1328
        %v1751 = vpop.f32.mrb[0].mxu0
        %v1752 = vadd.f32 %v1375, %v1751
        %v1753 = vpop.f32.mrb[0].mxu0
        %v1754 = vadd.f32 %v1379, %v1753
        %v1755 = vpop.f32.mrb[0].mxu0
        %v1756 = vadd.f32 %v1375, %v1755
        %v1757 = vpop.f32.mrb[0].mxu0
        %v1758 = vadd.f32 %v1379, %v1757
        %1759 = vmatprep.mubr.bf16.mxu0 0
        %1760 = vmatmul.mubr.bf16.gmra.mrb[0].mxu0 %v1329
        %v1761 = vpop.f32.mrb[0].mxu0
        %v1762 = vadd.f32 %v1375, %v1761
        %v1763 = vpop.f32.mrb[0].mxu0
        %v1764 = vadd.f32 %v1379, %v1763
        %v1765 = vpop.f32.mrb[0].mxu0
        %v1766 = vadd.f32 %v1375, %v1765
        %v1767 = vpop.f32.mrb[0].mxu0
        %v1768 = vadd.f32 %v1379, %v1767
        %1769 = vdwg.mxu0
        %v1770 = vmax.f32 %v1579, 0.0
        %v1771 = vmax.f32 %v1581, 0.0
        %v1772 = vmax.f32 %v1692, 0.0
        %v1773 = vmax.f32 %v1694, 0.0
        %v1774 = vmax.f32 %v1583, 0.0
        %v1775 = vmax.f32 %v1585, 0.0
        %v1776 = vmax.f32 %v1696, 0.0
        %v1777 = vmax.f32 %v1698, 0.0
        %v1778 = vmax.f32 %v1589, 0.0
        %v1779 = vmax.f32 %v1591, 0.0
        %v1780 = vmax.f32 %v1702, 0.0
        %v1781 = vmax.f32 %v1704, 0.0
        %v1782 = vmax.f32 %v1593, 0.0
        %v1783 = vmax.f32 %v1595, 0.0
        %v1784 = vmax.f32 %v1706, 0.0
        %v1785 = vmax.f32 %v1708, 0.0
        %v1786 = vmax.f32 %v1599, 0.0
        %v1787 = vmax.f32 %v1601, 0.0
        %v1788 = vmax.f32 %v1712, 0.0
        %v1789 = vmax.f32 %v1714, 0.0
        %v1790 = vmax.f32 %v1603, 0.0
        %v1791 = vmax.f32 %v1605, 0.0
        %v1792 = vmax.f32 %v1716, 0.0
        %v1793 = vmax.f32 %v1718, 0.0
        %v1794 = vmax.f32 %v1609, 0.0
        %v1795 = vmax.f32 %v1611, 0.0
        %v1796 = vmax.f32 %v1722, 0.0
        %v1797 = vmax.f32 %v1724, 0.0
        %v1798 = vmax.f32 %v1613, 0.0
        %v1799 = vmax.f32 %v1615, 0.0
        %v1800 = vmax.f32 %v1726, 0.0
        %v1801 = vmax.f32 %v1728, 0.0
        %v1802 = vmax.f32 %v1619, 0.0
        %v1803 = vmax.f32 %v1621, 0.0
        %v1804 = vmax.f32 %v1732, 0.0
        %v1805 = vmax.f32 %v1734, 0.0
        %v1806 = vmax.f32 %v1623, 0.0
        %v1807 = vmax.f32 %v1625, 0.0
        %v1808 = vmax.f32 %v1736, 0.0
        %v1809 = vmax.f32 %v1738, 0.0
        %v1810 = vmax.f32 %v1629, 0.0
        %v1811 = vmax.f32 %v1631, 0.0
        %v1812 = vmax.f32 %v1742, 0.0
        %v1813 = vmax.f32 %v1744, 0.0
        %v1814 = vmax.f32 %v1633, 0.0
        %v1815 = vmax.f32 %v1635, 0.0
        %v1816 = vmax.f32 %v1746, 0.0
        %v1817 = vmax.f32 %v1748, 0.0
        %v1818 = vmax.f32 %v1639, 0.0
        %v1819 = vmax.f32 %v1641, 0.0
        %v1820 = vmax.f32 %v1752, 0.0
        %v1821 = vmax.f32 %v1754, 0.0
        %v1822 = vmax.f32 %v1643, 0.0
        %v1823 = vmax.f32 %v1645, 0.0
        %v1824 = vmax.f32 %v1756, 0.0
        %v1825 = vmax.f32 %v1758, 0.0
        %v1826 = vmax.f32 %v1649, 0.0
        %v1827 = vmax.f32 %v1651, 0.0
        %v1828 = vmax.f32 %v1762, 0.0
        %v1829 = vmax.f32 %v1764, 0.0
        %v1830 = vmax.f32 %v1653, 0.0
        %v1831 = vmax.f32 %v1655, 0.0
        %v1832 = vmax.f32 %v1766, 0.0
        %v1833 = vmax.f32 %v1768, 0.0
        %v1834 = vpack.c.bf16 %v1774, %v1770
        %v1835 = vpack.c.bf16 %v1775, %v1771
        %v1836 = vpack.c.bf16 %v1776, %v1772
        %v1837 = vpack.c.bf16 %v1777, %v1773
        %v1838 = vpack.c.bf16 %v1782, %v1778
        %v1839 = vpack.c.bf16 %v1783, %v1779
        %v1840 = vpack.c.bf16 %v1784, %v1780
        %v1841 = vpack.c.bf16 %v1785, %v1781
        %v1842 = vpack.c.bf16 %v1790, %v1786
        %v1843 = vpack.c.bf16 %v1791, %v1787
        %v1844 = vpack.c.bf16 %v1792, %v1788
        %v1845 = vpack.c.bf16 %v1793, %v1789
        %v1846 = vpack.c.bf16 %v1798, %v1794
        %v1847 = vpack.c.bf16 %v1799, %v1795
        %v1848 = vpack.c.bf16 %v1800, %v1796
        %v1849 = vpack.c.bf16 %v1801, %v1797
        %v1850 = vpack.c.bf16 %v1806, %v1802
        %v1851 = vpack.c.bf16 %v1807, %v1803
        %v1852 = vpack.c.bf16 %v1808, %v1804
        %v1853 = vpack.c.bf16 %v1809, %v1805
        %v1854 = vpack.c.bf16 %v1814, %v1810
        %v1855 = vpack.c.bf16 %v1815, %v1811
        %v1856 = vpack.c.bf16 %v1816, %v1812
        %v1857 = vpack.c.bf16 %v1817, %v1813
        %v1858 = vpack.c.bf16 %v1822, %v1818
        %v1859 = vpack.c.bf16 %v1823, %v1819
        %v1860 = vpack.c.bf16 %v1824, %v1820
        %v1861 = vpack.c.bf16 %v1825, %v1821
        %v1862 = vpack.c.bf16 %v1830, %v1826
        %v1863 = vpack.c.bf16 %v1831, %v1827
        %v1864 = vpack.c.bf16 %v1832, %v1828
        %v1865 = vpack.c.bf16 %v1833, %v1829
        %v1866 = vld [vmem:[#allocation4] sm:$0xf]
        %v1867 = vld [vmem:[#allocation4 + $0x4] sm:$0xf]
        %v1868 = vld [vmem:[#allocation4 + $0x8] sm:$0xf]
        %v1869 = vld [vmem:[#allocation4 + $0xc] sm:$0xf]
        %v1870 = vld [vmem:[#allocation4 + $0x10] sm:$0xf]
        %v1871 = vld [vmem:[#allocation4 + $0x14] sm:$0xf]
        %v1872 = vld [vmem:[#allocation4 + $0x18] sm:$0xf]
        %v1873 = vld [vmem:[#allocation4 + $0x1c] sm:$0xf]
        %v1874 = vld [vmem:[#allocation4 + $0x20] sm:$0xf]
        %v1875 = vld [vmem:[#allocation4 + $0x24] sm:$0xf]
        %v1876 = vld [vmem:[#allocation4 + $0x28] sm:$0xf]
        %v1877 = vld [vmem:[#allocation4 + $0x2c] sm:$0xf]
        %v1878 = vld [vmem:[#allocation4 + $0x30] sm:$0xf]
        %v1879 = vld [vmem:[#allocation4 + $0x34] sm:$0xf]
        %v1880 = vld [vmem:[#allocation4 + $0x38] sm:$0xf]
        %v1881 = vld [vmem:[#allocation4 + $0x3c] sm:$0xf]
        %v1882 = vld [vmem:[#allocation4 + $0x40] sm:$0xf]
        %v1883 = vld [vmem:[#allocation4 + $0x44] sm:$0xf]
        %v1884 = vld [vmem:[#allocation4 + $0x48] sm:$0xf]
        %v1885 = vld [vmem:[#allocation4 + $0x4c] sm:$0xf]
        %v1886 = vld [vmem:[#allocation4 + $0x50] sm:$0xf]
        %v1887 = vld [vmem:[#allocation4 + $0x54] sm:$0xf]
        %v1888 = vld [vmem:[#allocation4 + $0x58] sm:$0xf]
        %v1889 = vld [vmem:[#allocation4 + $0x5c] sm:$0xf]
        %v1890 = vld [vmem:[#allocation4 + $0x60] sm:$0xf]
        %v1891 = vld [vmem:[#allocation4 + $0x64] sm:$0xf]
        %v1892 = vld [vmem:[#allocation4 + $0x68] sm:$0xf]
        %v1893 = vld [vmem:[#allocation4 + $0x6c] sm:$0xf]
        %v1894 = vld [vmem:[#allocation4 + $0x70] sm:$0xf]
        %v1895 = vld [vmem:[#allocation4 + $0x74] sm:$0xf]
        %v1896 = vld [vmem:[#allocation4 + $0x78] sm:$0xf]
        %v1897 = vld [vmem:[#allocation4 + $0x7c] sm:$0xf]
        %v1898 = vld [vmem:[#allocation4 + $0x80] sm:$0xf]
        %v1899 = vld [vmem:[#allocation4 + $0x84] sm:$0xf]
        %v1900 = vld [vmem:[#allocation4 + $0x88] sm:$0xf]
        %v1901 = vld [vmem:[#allocation4 + $0x8c] sm:$0xf]
        %v1902 = vld [vmem:[#allocation4 + $0x90] sm:$0xf]
        %v1903 = vld [vmem:[#allocation4 + $0x94] sm:$0xf]
        %v1904 = vld [vmem:[#allocation4 + $0x98] sm:$0xf]
        %v1905 = vld [vmem:[#allocation4 + $0x9c] sm:$0xf]
        %v1906 = vld [vmem:[#allocation4 + $0xa0] sm:$0xf]
        %v1907 = vld [vmem:[#allocation4 + $0xa4] sm:$0xf]
        %v1908 = vld [vmem:[#allocation4 + $0xa8] sm:$0xf]
        %v1909 = vld [vmem:[#allocation4 + $0xac] sm:$0xf]
        %v1910 = vld [vmem:[#allocation4 + $0xb0] sm:$0xf]
        %v1911 = vld [vmem:[#allocation4 + $0xb4] sm:$0xf]
        %v1912 = vld [vmem:[#allocation4 + $0xb8] sm:$0xf]
        %v1913 = vld [vmem:[#allocation4 + $0xbc] sm:$0xf]
        %v1914 = vld [vmem:[#allocation4 + $0xc0] sm:$0xf]
        %v1915 = vld [vmem:[#allocation4 + $0xc4] sm:$0xf]
        %v1916 = vld [vmem:[#allocation4 + $0xc8] sm:$0xf]
        %v1917 = vld [vmem:[#allocation4 + $0xcc] sm:$0xf]
        %v1918 = vld [vmem:[#allocation4 + $0xd0] sm:$0xf]
        %v1919 = vld [vmem:[#allocation4 + $0xd4] sm:$0xf]
        %v1920 = vld [vmem:[#allocation4 + $0xd8] sm:$0xf]
        %v1921 = vld [vmem:[#allocation4 + $0xdc] sm:$0xf]
        %v1922 = vld [vmem:[#allocation4 + $0xe0] sm:$0xf]
        %v1923 = vld [vmem:[#allocation4 + $0xe4] sm:$0xf]
        %v1924 = vld [vmem:[#allocation4 + $0xe8] sm:$0xf]
        %v1925 = vld [vmem:[#allocation4 + $0xec] sm:$0xf]
        %v1926 = vld [vmem:[#allocation4 + $0xf0] sm:$0xf]
        %v1927 = vld [vmem:[#allocation4 + $0xf4] sm:$0xf]
        %v1928 = vld [vmem:[#allocation4 + $0xf8] sm:$0xf]
        %v1929 = vld [vmem:[#allocation4 + $0xfc] sm:$0xf]
        %v1930 = vld [vmem:[%s8] sm:$0x1]
        %v1932 = vlaneseq
        %v1933 = vshrl.u32 %v1932, 7
        %v1934 = vsub.s32 0, %v1933
        %v1935 = vrot.slane %v1930, %v1934
        %v2001 = vunpack.c.l.b16 %v1866
        %v2002 = vunpack.c.l.b16 %v1867
        %v2003 = vunpack.c.l.b16 %v1868
        %v2004 = vunpack.c.l.b16 %v1869
        %v2005 = vunpack.c.l.b16 %v1870
        %v2006 = vunpack.c.l.b16 %v1871
        %v2007 = vunpack.c.l.b16 %v1872
        %v2008 = vunpack.c.l.b16 %v1873
        %v2009 = vunpack.c.l.b16 %v1874
        %v2010 = vunpack.c.l.b16 %v1875
        %v2011 = vunpack.c.l.b16 %v1876
        %v2012 = vunpack.c.l.b16 %v1877
        %v2013 = vunpack.c.l.b16 %v1878
        %v2014 = vunpack.c.l.b16 %v1879
        %v2015 = vunpack.c.l.b16 %v1880
        %v2016 = vunpack.c.l.b16 %v1881
        %v2017 = vunpack.c.l.b16 %v1882
        %v2018 = vunpack.c.l.b16 %v1883
        %v2019 = vunpack.c.l.b16 %v1884
        %v2020 = vunpack.c.l.b16 %v1885
        %v2021 = vunpack.c.l.b16 %v1886
        %v2022 = vunpack.c.l.b16 %v1887
        %v2023 = vunpack.c.l.b16 %v1888
        %v2024 = vunpack.c.l.b16 %v1889
        %v2025 = vunpack.c.l.b16 %v1890
        %v2026 = vunpack.c.l.b16 %v1891
        %v2027 = vunpack.c.l.b16 %v1892
        %v2028 = vunpack.c.l.b16 %v1893
        %v2029 = vunpack.c.l.b16 %v1894
        %v2030 = vunpack.c.l.b16 %v1895
        %v2031 = vunpack.c.l.b16 %v1896
        %v2032 = vunpack.c.l.b16 %v1897
        %v2033 = vunpack.c.l.b16 %v1898
        %v2034 = vunpack.c.l.b16 %v1899
        %v2035 = vunpack.c.l.b16 %v1900
        %v2036 = vunpack.c.l.b16 %v1901
        %v2037 = vunpack.c.l.b16 %v1902
        %v2038 = vunpack.c.l.b16 %v1903
        %v2039 = vunpack.c.l.b16 %v1904
        %v2040 = vunpack.c.l.b16 %v1905
        %v2041 = vunpack.c.l.b16 %v1906
        %v2042 = vunpack.c.l.b16 %v1907
        %v2043 = vunpack.c.l.b16 %v1908
        %v2044 = vunpack.c.l.b16 %v1909
        %v2045 = vunpack.c.l.b16 %v1910
        %v2046 = vunpack.c.l.b16 %v1911
        %v2047 = vunpack.c.l.b16 %v1912
        %v2048 = vunpack.c.l.b16 %v1913
        %v2049 = vunpack.c.l.b16 %v1914
        %v2050 = vunpack.c.l.b16 %v1915
        %v2051 = vunpack.c.l.b16 %v1916
        %v2052 = vunpack.c.l.b16 %v1917
        %v2053 = vunpack.c.l.b16 %v1918
        %v2054 = vunpack.c.l.b16 %v1919
        %v2055 = vunpack.c.l.b16 %v1920
        %v2056 = vunpack.c.l.b16 %v1921
        %v2057 = vunpack.c.l.b16 %v1922
        %v2058 = vunpack.c.l.b16 %v1923
        %v2059 = vunpack.c.l.b16 %v1924
        %v2060 = vunpack.c.l.b16 %v1925
        %v2061 = vunpack.c.l.b16 %v1926
        %v2062 = vunpack.c.l.b16 %v1927
        %v2063 = vunpack.c.l.b16 %v1928
        %v2064 = vunpack.c.l.b16 %v1929
        %v2065 = vpack.c.b16 %v2002, %v2001
        %v2066 = vpack.c.b16 %v2004, %v2003
        %v2067 = vpack.c.b16 %v2006, %v2005
        %v2068 = vpack.c.b16 %v2008, %v2007
        %v2069 = vpack.c.b16 %v2010, %v2009
        %v2070 = vpack.c.b16 %v2012, %v2011
        %v2071 = vpack.c.b16 %v2014, %v2013
        %v2072 = vpack.c.b16 %v2016, %v2015
        %v2073 = vpack.c.b16 %v2018, %v2017
        %v2074 = vpack.c.b16 %v2020, %v2019
        %v2075 = vpack.c.b16 %v2022, %v2021
        %v2076 = vpack.c.b16 %v2024, %v2023
        %v2077 = vpack.c.b16 %v2026, %v2025
        %v2078 = vpack.c.b16 %v2028, %v2027
        %v2079 = vpack.c.b16 %v2030, %v2029
        %v2080 = vpack.c.b16 %v2032, %v2031
        %v2081 = vpack.c.b16 %v2034, %v2033
        %v2082 = vpack.c.b16 %v2036, %v2035
        %v2083 = vpack.c.b16 %v2038, %v2037
        %v2084 = vpack.c.b16 %v2040, %v2039
        %v2085 = vpack.c.b16 %v2042, %v2041
        %v2086 = vpack.c.b16 %v2044, %v2043
        %v2087 = vpack.c.b16 %v2046, %v2045
        %v2088 = vpack.c.b16 %v2048, %v2047
        %v2089 = vpack.c.b16 %v2050, %v2049
        %v2090 = vpack.c.b16 %v2052, %v2051
        %v2091 = vpack.c.b16 %v2054, %v2053
        %v2092 = vpack.c.b16 %v2056, %v2055
        %v2093 = vpack.c.b16 %v2058, %v2057
        %v2094 = vpack.c.b16 %v2060, %v2059
        %v2095 = vpack.c.b16 %v2062, %v2061
        %v2096 = vpack.c.b16 %v2064, %v2063
        %2129 = vmatprep.subr.bf16.mxu0 0
        %2130 = vmatpush1.bf16.msra.mxu0 %v2065
        %2131 = vmatprep.subr.bf16.mxu0 0
        %2132 = vmatpush1.bf16.msra.mxu0 %v2066
        %2133 = vmatprep.subr.bf16.mxu0 0
        %2134 = vmatpush1.bf16.msra.mxu0 %v2067
        %2135 = vmatprep.subr.bf16.mxu0 0
        %2136 = vmatpush1.bf16.msra.mxu0 %v2068
        %2137 = vmatprep.subr.bf16.mxu0 0
        %2138 = vmatpush1.bf16.msra.mxu0 %v2069
        %2139 = vmatprep.subr.bf16.mxu0 0
        %2140 = vmatpush1.bf16.msra.mxu0 %v2070
        %2141 = vmatprep.subr.bf16.mxu0 0
        %2142 = vmatpush1.bf16.msra.mxu0 %v2071
        %2143 = vmatprep.subr.bf16.mxu0 0
        %2144 = vmatpush1.bf16.msra.mxu0 %v2072
        %2145 = vmatprep.subr.bf16.mxu0 0
        %2146 = vmatpush1.bf16.msra.mxu0 %v2073
        %2147 = vmatprep.subr.bf16.mxu0 0
        %2148 = vmatpush1.bf16.msra.mxu0 %v2074
        %2149 = vmatprep.subr.bf16.mxu0 0
        %2150 = vmatpush1.bf16.msra.mxu0 %v2075
        %2151 = vmatprep.subr.bf16.mxu0 0
        %2152 = vmatpush1.bf16.msra.mxu0 %v2076
        %2153 = vmatprep.subr.bf16.mxu0 0
        %2154 = vmatpush1.bf16.msra.mxu0 %v2077
        %2155 = vmatprep.subr.bf16.mxu0 0
        %2156 = vmatpush1.bf16.msra.mxu0 %v2078
        %2157 = vmatprep.subr.bf16.mxu0 0
        %2158 = vmatpush1.bf16.msra.mxu0 %v2079
        %2159 = vmatprep.subr.bf16.mxu0 0
        %2160 = vmatpush1.bf16.msra.mxu0 %v2080
        %2161 = vmatprep.mubr.bf16.mxu0 %v1835
        %2162 = vmatmul.mubr.bf16.gmra.mrb[0].mxu0 %v1834
        %v2163 = vpop.f32.mrb[0].mxu0
        %v2164 = vadd.f32 %v1935, %v2163
        %v2165 = vpop.f32.mrb[0].mxu0
        %v2166 = vpop.f32.mrb[0].mxu0
        %v2167 = vadd.f32 %v1935, %v2166
        %v2168 = vpop.f32.mrb[0].mxu0
        %2169 = vmatprep.mubr.bf16.mxu0 %v1839
        %2170 = vmatmul.mubr.bf16.gmra.mrb[0].mxu0 %v1838
        %v2171 = vpop.f32.mrb[0].mxu0
        %v2172 = vadd.f32 %v1935, %v2171
        %v2173 = vpop.f32.mrb[0].mxu0
        %v2174 = vpop.f32.mrb[0].mxu0
        %v2175 = vadd.f32 %v1935, %v2174
        %v2176 = vpop.f32.mrb[0].mxu0
        %2177 = vmatprep.mubr.bf16.mxu0 %v1843
        %2178 = vmatmul.mubr.bf16.gmra.mrb[0].mxu0 %v1842
        %v2179 = vpop.f32.mrb[0].mxu0
        %v2180 = vadd.f32 %v1935, %v2179
        %v2181 = vpop.f32.mrb[0].mxu0
        %v2182 = vpop.f32.mrb[0].mxu0
        %v2183 = vadd.f32 %v1935, %v2182
        %v2184 = vpop.f32.mrb[0].mxu0
        %2185 = vmatprep.mubr.bf16.mxu0 %v1847
        %2186 = vmatmul.mubr.bf16.gmra.mrb[0].mxu0 %v1846
        %v2187 = vpop.f32.mrb[0].mxu0
        %v2188 = vadd.f32 %v1935, %v2187
        %v2189 = vpop.f32.mrb[0].mxu0
        %v2190 = vpop.f32.mrb[0].mxu0
        %v2191 = vadd.f32 %v1935, %v2190
        %v2192 = vpop.f32.mrb[0].mxu0
        %2193 = vmatprep.mubr.bf16.mxu0 %v1851
        %2194 = vmatmul.mubr.bf16.gmra.mrb[0].mxu0 %v1850
        %v2195 = vpop.f32.mrb[0].mxu0
        %v2196 = vadd.f32 %v1935, %v2195
        %v2197 = vpop.f32.mrb[0].mxu0
        %v2198 = vpop.f32.mrb[0].mxu0
        %v2199 = vadd.f32 %v1935, %v2198
        %v2200 = vpop.f32.mrb[0].mxu0
        %2201 = vmatprep.mubr.bf16.mxu0 %v1855
        %2202 = vmatmul.mubr.bf16.gmra.mrb[0].mxu0 %v1854
        %v2203 = vpop.f32.mrb[0].mxu0
        %v2204 = vadd.f32 %v1935, %v2203
        %v2205 = vpop.f32.mrb[0].mxu0
        %v2206 = vpop.f32.mrb[0].mxu0
        %v2207 = vadd.f32 %v1935, %v2206
        %v2208 = vpop.f32.mrb[0].mxu0
        %2209 = vmatprep.mubr.bf16.mxu0 %v1859
        %2210 = vmatmul.mubr.bf16.gmra.mrb[0].mxu0 %v1858
        %v2211 = vpop.f32.mrb[0].mxu0
        %v2212 = vadd.f32 %v1935, %v2211
        %v2213 = vpop.f32.mrb[0].mxu0
        %v2214 = vpop.f32.mrb[0].mxu0
        %v2215 = vadd.f32 %v1935, %v2214
        %v2216 = vpop.f32.mrb[0].mxu0
        %2217 = vmatprep.mubr.bf16.mxu0 %v1863
        %2218 = vmatmul.mubr.bf16.gmra.mrb[0].mxu0 %v1862
        %v2219 = vpop.f32.mrb[0].mxu0
        %v2220 = vadd.f32 %v1935, %v2219
        %v2221 = vpop.f32.mrb[0].mxu0
        %v2222 = vpop.f32.mrb[0].mxu0
        %v2223 = vadd.f32 %v1935, %v2222
        %v2224 = vpop.f32.mrb[0].mxu0
        %2225 = vdwg.mxu0
        %2226 = vmatprep.subr.bf16.mxu0 0
        %2227 = vmatpush1.bf16.msra.mxu0 %v2081
        %2228 = vmatprep.subr.bf16.mxu0 0
        %2229 = vmatpush1.bf16.msra.mxu0 %v2082
        %2230 = vmatprep.subr.bf16.mxu0 0
        %2231 = vmatpush1.bf16.msra.mxu0 %v2083
        %2232 = vmatprep.subr.bf16.mxu0 0
        %2233 = vmatpush1.bf16.msra.mxu0 %v2084
        %2234 = vmatprep.subr.bf16.mxu0 0
        %2235 = vmatpush1.bf16.msra.mxu0 %v2085
        %2236 = vmatprep.subr.bf16.mxu0 0
        %2237 = vmatpush1.bf16.msra.mxu0 %v2086
        %2238 = vmatprep.subr.bf16.mxu0 0
        %2239 = vmatpush1.bf16.msra.mxu0 %v2087
        %2240 = vmatprep.subr.bf16.mxu0 0
        %2241 = vmatpush1.bf16.msra.mxu0 %v2088
        %2242 = vmatprep.subr.bf16.mxu0 0
        %2243 = vmatpush1.bf16.msra.mxu0 %v2089
        %2244 = vmatprep.subr.bf16.mxu0 0
        %2245 = vmatpush1.bf16.msra.mxu0 %v2090
        %2246 = vmatprep.subr.bf16.mxu0 0
        %2247 = vmatpush1.bf16.msra.mxu0 %v2091
        %2248 = vmatprep.subr.bf16.mxu0 0
        %2249 = vmatpush1.bf16.msra.mxu0 %v2092
        %2250 = vmatprep.subr.bf16.mxu0 0
        %2251 = vmatpush1.bf16.msra.mxu0 %v2093
        %2252 = vmatprep.subr.bf16.mxu0 0
        %2253 = vmatpush1.bf16.msra.mxu0 %v2094
        %2254 = vmatprep.subr.bf16.mxu0 0
        %2255 = vmatpush1.bf16.msra.mxu0 %v2095
        %2256 = vmatprep.subr.bf16.mxu0 0
        %2257 = vmatpush1.bf16.msra.mxu0 %v2096
        %2258 = vmatprep.mubr.bf16.mxu0 %v1837
        %2259 = vmatmul.mubr.bf16.gmra.mrb[0].mxu0 %v1836
        %v2260 = vpop.f32.mrb[0].mxu0
        %v2261 = vadd.f32 %v2164, %v2260
        %v2262 = vpop.f32.mrb[0].mxu0
        %v2263 = vpop.f32.mrb[0].mxu0
        %v2264 = vadd.f32 %v2167, %v2263
        %v2265 = vpop.f32.mrb[0].mxu0
        %2266 = vmatprep.mubr.bf16.mxu0 %v1841
        %2267 = vmatmul.mubr.bf16.gmra.mrb[0].mxu0 %v1840
        %v2268 = vpop.f32.mrb[0].mxu0
        %v2269 = vadd.f32 %v2172, %v2268
        %v2270 = vpop.f32.mrb[0].mxu0
        %v2271 = vpop.f32.mrb[0].mxu0
        %v2272 = vadd.f32 %v2175, %v2271
        %v2273 = vpop.f32.mrb[0].mxu0
        %2274 = vmatprep.mubr.bf16.mxu0 %v1845
        %2275 = vmatmul.mubr.bf16.gmra.mrb[0].mxu0 %v1844
        %v2276 = vpop.f32.mrb[0].mxu0
        %v2277 = vadd.f32 %v2180, %v2276
        %v2278 = vpop.f32.mrb[0].mxu0
        %v2279 = vpop.f32.mrb[0].mxu0
        %v2280 = vadd.f32 %v2183, %v2279
        %v2281 = vpop.f32.mrb[0].mxu0
        %2282 = vmatprep.mubr.bf16.mxu0 %v1849
        %2283 = vmatmul.mubr.bf16.gmra.mrb[0].mxu0 %v1848
        %v2284 = vpop.f32.mrb[0].mxu0
        %v2285 = vadd.f32 %v2188, %v2284
        %v2286 = vpop.f32.mrb[0].mxu0
        %v2287 = vpop.f32.mrb[0].mxu0
        %v2288 = vadd.f32 %v2191, %v2287
        %v2289 = vpop.f32.mrb[0].mxu0
        %2290 = vmatprep.mubr.bf16.mxu0 %v1853
        %2291 = vmatmul.mubr.bf16.gmra.mrb[0].mxu0 %v1852
        %v2292 = vpop.f32.mrb[0].mxu0
        %v2293 = vadd.f32 %v2196, %v2292
        %v2294 = vpop.f32.mrb[0].mxu0
        %v2295 = vpop.f32.mrb[0].mxu0
        %v2296 = vadd.f32 %v2199, %v2295
        %v2297 = vpop.f32.mrb[0].mxu0
        %2298 = vmatprep.mubr.bf16.mxu0 %v1857
        %2299 = vmatmul.mubr.bf16.gmra.mrb[0].mxu0 %v1856
        %v2300 = vpop.f32.mrb[0].mxu0
        %v2301 = vadd.f32 %v2204, %v2300
        %v2302 = vpop.f32.mrb[0].mxu0
        %v2303 = vpop.f32.mrb[0].mxu0
        %v2304 = vadd.f32 %v2207, %v2303
        %v2305 = vpop.f32.mrb[0].mxu0
        %2306 = vmatprep.mubr.bf16.mxu0 %v1861
        %2307 = vmatmul.mubr.bf16.gmra.mrb[0].mxu0 %v1860
        %v2308 = vpop.f32.mrb[0].mxu0
        %v2309 = vadd.f32 %v2212, %v2308
        %v2310 = vpop.f32.mrb[0].mxu0
        %v2311 = vpop.f32.mrb[0].mxu0
        %v2312 = vadd.f32 %v2215, %v2311
        %v2313 = vpop.f32.mrb[0].mxu0
        %2314 = vmatprep.mubr.bf16.mxu0 %v1865
        %2315 = vmatmul.mubr.bf16.gmra.mrb[0].mxu0 %v1864
        %v2316 = vpop.f32.mrb[0].mxu0
        %v2317 = vadd.f32 %v2220, %v2316
        %v2318 = vpop.f32.mrb[0].mxu0
        %v2319 = vpop.f32.mrb[0].mxu0
        %v2320 = vadd.f32 %v2223, %v2319
        %v2321 = vpop.f32.mrb[0].mxu0
        %2322 = vdwg.mxu0
        %v2323 = vxor.u32 %v2261, 2147483648
        %v2324 = vxor.u32 %v2264, 2147483648
        %v2325 = vxor.u32 %v2269, 2147483648
        %v2326 = vxor.u32 %v2272, 2147483648
        %v2327 = vxor.u32 %v2277, 2147483648
        %v2328 = vxor.u32 %v2280, 2147483648
        %v2329 = vxor.u32 %v2285, 2147483648
        %v2330 = vxor.u32 %v2288, 2147483648
        %v2331 = vxor.u32 %v2293, 2147483648
        %v2332 = vxor.u32 %v2296, 2147483648
        %v2333 = vxor.u32 %v2301, 2147483648
        %v2334 = vxor.u32 %v2304, 2147483648
        %v2335 = vxor.u32 %v2309, 2147483648
        %v2336 = vxor.u32 %v2312, 2147483648
        %v2337 = vxor.u32 %v2317, 2147483648
        %v2338 = vxor.u32 %v2320, 2147483648
        %v2339 = vmul.f32 %v2323, 1.442695
        %v2340 = vpow.pop %v2339
        %v2341 = vmul.f32 %v2324, 1.442695
        %v2342 = vpow.pop %v2341
        %v2343 = vmul.f32 %v2325, 1.442695
        %v2344 = vpow.pop %v2343
        %v2345 = vmul.f32 %v2326, 1.442695
        %v2346 = vpow.pop %v2345
        %v2347 = vmul.f32 %v2327, 1.442695
        %v2348 = vpow.pop %v2347
        %v2349 = vmul.f32 %v2328, 1.442695
        %v2350 = vpow.pop %v2349
        %v2351 = vmul.f32 %v2329, 1.442695
        %v2352 = vpow.pop %v2351
        %v2353 = vmul.f32 %v2330, 1.442695
        %v2354 = vpow.pop %v2353
        %v2355 = vmul.f32 %v2331, 1.442695
        %v2356 = vpow.pop %v2355
        %v2357 = vmul.f32 %v2332, 1.442695
        %v2358 = vpow.pop %v2357
        %v2359 = vmul.f32 %v2333, 1.442695
        %v2360 = vpow.pop %v2359
        %v2361 = vmul.f32 %v2334, 1.442695
        %v2362 = vpow.pop %v2361
        %v2363 = vmul.f32 %v2335, 1.442695
        %v2364 = vpow.pop %v2363
        %v2365 = vmul.f32 %v2336, 1.442695
        %v2366 = vpow.pop %v2365
        %v2367 = vmul.f32 %v2337, 1.442695
        %v2368 = vpow.pop %v2367
        %v2369 = vmul.f32 %v2338, 1.442695
        %v2370 = vpow.pop %v2369
        %v2371 = vadd.f32 %v2340, 1.0
        %v2372 = vadd.f32 %v2342, 1.0
        %v2373 = vadd.f32 %v2344, 1.0
        %v2374 = vadd.f32 %v2346, 1.0
        %v2375 = vadd.f32 %v2348, 1.0
        %v2376 = vadd.f32 %v2350, 1.0
        %v2377 = vadd.f32 %v2352, 1.0
        %v2378 = vadd.f32 %v2354, 1.0
        %v2379 = vadd.f32 %v2356, 1.0
        %v2380 = vadd.f32 %v2358, 1.0
        %v2381 = vadd.f32 %v2360, 1.0
        %v2382 = vadd.f32 %v2362, 1.0
        %v2383 = vadd.f32 %v2364, 1.0
        %v2384 = vadd.f32 %v2366, 1.0
        %v2385 = vadd.f32 %v2368, 1.0
        %v2386 = vadd.f32 %v2370, 1.0
        %v2387 = vrcp.pop %v2371
        %v2388 = vmul.f32 1.0, %v2387
        %v2389 = vrcp.pop %v2372
        %v2390 = vmul.f32 1.0, %v2389
        %v2391 = vrcp.pop %v2373
        %v2392 = vmul.f32 1.0, %v2391
        %v2393 = vrcp.pop %v2374
        %v2394 = vmul.f32 1.0, %v2393
        %v2395 = vrcp.pop %v2375
        %v2396 = vmul.f32 1.0, %v2395
        %v2397 = vrcp.pop %v2376
        %v2398 = vmul.f32 1.0, %v2397
        %v2399 = vrcp.pop %v2377
        %v2400 = vmul.f32 1.0, %v2399
        %v2401 = vrcp.pop %v2378
        %v2402 = vmul.f32 1.0, %v2401
        %v2403 = vrcp.pop %v2379
        %v2404 = vmul.f32 1.0, %v2403
        %v2405 = vrcp.pop %v2380
        %v2406 = vmul.f32 1.0, %v2405
        %v2407 = vrcp.pop %v2381
        %v2408 = vmul.f32 1.0, %v2407
        %v2409 = vrcp.pop %v2382
        %v2410 = vmul.f32 1.0, %v2409
        %v2411 = vrcp.pop %v2383
        %v2412 = vmul.f32 1.0, %v2411
        %v2413 = vrcp.pop %v2384
        %v2414 = vmul.f32 1.0, %v2413
        %v2415 = vrcp.pop %v2385
        %v2416 = vmul.f32 1.0, %v2415
        %v2417 = vrcp.pop %v2386
        %v2418 = vmul.f32 1.0, %v2417
        %v2427 = vunpack.c.l.b16 %v1322
        %v2428 = vunpack.c.h.b16 %v1322
        %v2429 = vunpack.c.l.b16 %v1323
        %v2430 = vunpack.c.h.b16 %v1323
        %v2431 = vunpack.c.l.b16 %v1324
        %v2432 = vunpack.c.h.b16 %v1324
        %v2433 = vunpack.c.l.b16 %v1325
        %v2434 = vunpack.c.h.b16 %v1325
        %v2435 = vunpack.c.l.b16 %v1326
        %v2436 = vunpack.c.h.b16 %v1326
        %v2437 = vunpack.c.l.b16 %v1327
        %v2438 = vunpack.c.h.b16 %v1327
        %v2439 = vunpack.c.l.b16 %v1328
        %v2440 = vunpack.c.h.b16 %v1328
        %v2441 = vunpack.c.l.b16 %v1329
        %v2442 = vunpack.c.h.b16 %v1329
        %v2443 = vpack.c.b16 %v2427, %v2427
        %v2444 = vpack.c.b16 %v2428, %v2428
        %v2445 = vpack.c.b16 %v2429, %v2429
        %v2446 = vpack.c.b16 %v2430, %v2430
        %v2447 = vpack.c.b16 %v2431, %v2431
        %v2448 = vpack.c.b16 %v2432, %v2432
        %v2449 = vpack.c.b16 %v2433, %v2433
        %v2450 = vpack.c.b16 %v2434, %v2434
        %v2451 = vpack.c.b16 %v2435, %v2435
        %v2452 = vpack.c.b16 %v2436, %v2436
        %v2453 = vpack.c.b16 %v2437, %v2437
        %v2454 = vpack.c.b16 %v2438, %v2438
        %v2455 = vpack.c.b16 %v2439, %v2439
        %v2456 = vpack.c.b16 %v2440, %v2440
        %v2457 = vpack.c.b16 %v2441, %v2441
        %v2458 = vpack.c.b16 %v2442, %v2442
        %2475 = vst [vmem:[%s399] sm:$0xf] %v2443
        %2476 = vst [vmem:[%s399 + $0x4] sm:$0xf] %v2444
        %2477 = vst [vmem:[%s399 + $0x8] sm:$0xf] %v2445
        %2478 = vst [vmem:[%s399 + $0xc] sm:$0xf] %v2446
        %2479 = vst [vmem:[%s399 + $0x10] sm:$0xf] %v2447
        %2480 = vst [vmem:[%s399 + $0x14] sm:$0xf] %v2448
        %2481 = vst [vmem:[%s399 + $0x18] sm:$0xf] %v2449
        %2482 = vst [vmem:[%s399 + $0x1c] sm:$0xf] %v2450
        %2483 = vst [vmem:[%s399 + $0x20] sm:$0xf] %v2451
        %2484 = vst [vmem:[%s399 + $0x24] sm:$0xf] %v2452
        %2485 = vst [vmem:[%s399 + $0x28] sm:$0xf] %v2453
        %2486 = vst [vmem:[%s399 + $0x2c] sm:$0xf] %v2454
        %2487 = vst [vmem:[%s399 + $0x30] sm:$0xf] %v2455
        %2488 = vst [vmem:[%s399 + $0x34] sm:$0xf] %v2456
        %2489 = vst [vmem:[%s399 + $0x38] sm:$0xf] %v2457
        %2490 = vst [vmem:[%s399 + $0x3c] sm:$0xf] %v2458
        %v2491 = vpack.c.bf16 %v2390, %v2388
        %v2492 = vpack.c.bf16 %v2394, %v2392
        %v2493 = vpack.c.bf16 %v2398, %v2396
        %v2494 = vpack.c.bf16 %v2402, %v2400
        %v2495 = vpack.c.bf16 %v2406, %v2404
        %v2496 = vpack.c.bf16 %v2410, %v2408
        %v2497 = vpack.c.bf16 %v2414, %v2412
        %v2498 = vpack.c.bf16 %v2418, %v2416
        %v2507 = vunpack.c.l.b16 %v2491
        %v2508 = vunpack.c.h.b16 %v2491
        %v2509 = vunpack.c.l.b16 %v2492
        %v2510 = vunpack.c.h.b16 %v2492
        %v2511 = vunpack.c.l.b16 %v2493
        %v2512 = vunpack.c.h.b16 %v2493
        %v2513 = vunpack.c.l.b16 %v2494
        %v2514 = vunpack.c.h.b16 %v2494
        %v2515 = vunpack.c.l.b16 %v2495
        %v2516 = vunpack.c.h.b16 %v2495
        %v2517 = vunpack.c.l.b16 %v2496
        %v2518 = vunpack.c.h.b16 %v2496
        %v2519 = vunpack.c.l.b16 %v2497
        %v2520 = vunpack.c.h.b16 %v2497
        %v2521 = vunpack.c.l.b16 %v2498
        %v2522 = vunpack.c.h.b16 %v2498
        %v2523 = vpack.c.b16 %v2507, %v2507
        %v2524 = vpack.c.b16 %v2508, %v2508
        %v2525 = vpack.c.b16 %v2509, %v2509
        %v2526 = vpack.c.b16 %v2510, %v2510
        %v2527 = vpack.c.b16 %v2511, %v2511
        %v2528 = vpack.c.b16 %v2512, %v2512
        %v2529 = vpack.c.b16 %v2513, %v2513
        %v2530 = vpack.c.b16 %v2514, %v2514
        %v2531 = vpack.c.b16 %v2515, %v2515
        %v2532 = vpack.c.b16 %v2516, %v2516
        %v2533 = vpack.c.b16 %v2517, %v2517
        %v2534 = vpack.c.b16 %v2518, %v2518
        %v2535 = vpack.c.b16 %v2519, %v2519
        %v2536 = vpack.c.b16 %v2520, %v2520
        %v2537 = vpack.c.b16 %v2521, %v2521
        %v2538 = vpack.c.b16 %v2522, %v2522
        %2555 = vst [vmem:[%s405] sm:$0xf] %v2523
        %2556 = vst [vmem:[%s405 + $0x4] sm:$0xf] %v2524
        %2557 = vst [vmem:[%s405 + $0x8] sm:$0xf] %v2525
        %2558 = vst [vmem:[%s405 + $0xc] sm:$0xf] %v2526
        %2559 = vst [vmem:[%s405 + $0x10] sm:$0xf] %v2527
        %2560 = vst [vmem:[%s405 + $0x14] sm:$0xf] %v2528
        %2561 = vst [vmem:[%s405 + $0x18] sm:$0xf] %v2529
        %2562 = vst [vmem:[%s405 + $0x1c] sm:$0xf] %v2530
        %2563 = vst [vmem:[%s405 + $0x20] sm:$0xf] %v2531
        %2564 = vst [vmem:[%s405 + $0x24] sm:$0xf] %v2532
        %2565 = vst [vmem:[%s405 + $0x28] sm:$0xf] %v2533
        %2566 = vst [vmem:[%s405 + $0x2c] sm:$0xf] %v2534
        %2567 = vst [vmem:[%s405 + $0x30] sm:$0xf] %v2535
        %2568 = vst [vmem:[%s405 + $0x34] sm:$0xf] %v2536
        %2569 = vst [vmem:[%s405 + $0x38] sm:$0xf] %v2537
        %2570 = vst [vmem:[%s405 + $0x3c] sm:$0xf] %v2538
        %s2571 = smul.u32 16, %s24
        %p2572 = scmp.lt.s32.totalorder %s2571, 31
        %s2573 = scalar_select %p2572, %s2571, 31
        %s2574 = smul.addr %s2573, 4
        %s2575 = scalar_lea.vmem %s9, %s2574
        %s2576 = smul.u32 16, %s24
        %p2577 = scmp.lt.s32.totalorder %s2576, 31
        %s2578 = scalar_select %p2577, %s2576, 31
        %s2579 = smul.addr %s2578, 4
        %s2580 = scalar_lea.vmem %s10, %s2579
        // Predicated region
        $region65: #{autoencoder_forward.1} parent=55 // pred_check
          %p2581 = pneg %p236
        $region66: #{autoencoder_forward.1} parent=55 // pred_check_branch
          %2583 = sbr.rel (%p2581) target = $region68
        $region67: #{autoencoder_forward.1} parent=55 // pred_region
          %s2584 = smul.u32 16, %s24
        $region68: #{autoencoder_forward.1} parent=55 // pred_fallthru
          _
        // Predicated region
        $region69: #{autoencoder_forward.1} parent=55 // pred_check
          %p2585 = pneg %p262
        $region70: #{autoencoder_forward.1} parent=55 // pred_check_branch
          %2587 = sbr.rel (%p2585) target = $region72
        $region71: #{autoencoder_forward.1} parent=55 // pred_region
          %s2588 = smul.u32 16, %s24
        $region72: #{autoencoder_forward.1} parent=55 // pred_fallthru
          _
      $region56: #{autoencoder_forward.1} parent=5 // pred_fallthru
        _
      %p2589 = scmp.le.s32.totalorder 2, %s19
      // Predicated region
      $region73: #{autoencoder_forward.1} parent=5 // pred_check
        %p2590 = pneg %p2589
      $region74: #{autoencoder_forward.1} parent=5 // pred_check_branch
        %2592 = sbr.rel (%p2590) target = $region76
      $region75: #{autoencoder_forward.1} parent=5 // pred_region
        %s2593 = ssub.s32 %s19, 2
        // Predicated region
        $region77: #{autoencoder_forward.1} parent=75 // pred_check
          %p2594 = pneg %p242
        $region78: #{autoencoder_forward.1} parent=75 // pred_check_branch
          %2596 = sbr.rel (%p2594) target = $region80
        $region79: #{autoencoder_forward.1} parent=75 // pred_region
          %s2597 = smul.u32 16, %s25
          %p2598 = scmp.lt.s32.totalorder %s2597, 31
          %s2599 = scalar_select %p2598, %s2597, 31
          %s2600 = smul.addr %s2599, 4
          %s2601 = scalar_lea.vmem %s9, %s2600
        $region80: #{autoencoder_forward.1} parent=75 // pred_fallthru
          _
        // Predicated region
        $region81: #{autoencoder_forward.1} parent=75 // pred_check
          %p2602 = pneg %p268
        $region82: #{autoencoder_forward.1} parent=75 // pred_check_branch
          %2604 = sbr.rel (%p2602) target = $region84
        $region83: #{autoencoder_forward.1} parent=75 // pred_region
          %s2605 = smul.u32 16, %s25
          %p2606 = scmp.lt.s32.totalorder %s2605, 31
          %s2607 = scalar_select %p2606, %s2605, 31
          %s2608 = smul.addr %s2607, 4
          %s2609 = scalar_lea.vmem %s10, %s2608
        $region84: #{autoencoder_forward.1} parent=75 // pred_fallthru
          _
      $region76: #{autoencoder_forward.1} parent=5 // pred_fallthru
        _
    $region6: #{autoencoder_forward.1} parent=1 // loop_footer
      %s23 = sadd.s32 1, %s19
    $region7: #{autoencoder_forward.1} parent=1 // loop_footer_branch
      %18 = sbr.rel target = $region3
    $region8: #{autoencoder_forward.1} parent=1 // loop_exit
      _
    %2610 = vsyncpa [#allocation3], 1
    %s2611 = scalar_lea.sflag [#allocation3], 1
    %2612 = vsyncpa %s2611, 1
    %2613 = vsyncpa [#allocation5], 1

</llo_original>
